<compile_context>
chip_gen: v7x
topology: tpu7x:2x2x1
jax: 0.10.0
libtpu: 0.0.40
codegen_flags: <defaults>
</compile_context>

<pallas_src>
import jax
import jax.numpy as jnp
from jax.experimental import pallas as pl
from jax.experimental.pallas import tpu as pltpu


# ----------------------------- Pallas kernel --------------------------------

def fused_kde_kernel(xs_ref, w_ref, misc_ref, wfc_ref,
                     l1_ref, l2_ref, l3_ref, p_ref):
    """Whole NetworkKDE forward (convs + FC + softmax) for one lane tile.

    Lane layout: batch and spatial axes are folded onto the lane axis,
    lane = b*(H*W) + h*W + w; every op in the net is lane-local so this is exact.

    xs_ref  : (2, T)          row 0 = x, row 1 = spatially transposed x  (Cin == 1)
    w_ref   : (8, C, C)       stacked conv weights [E2, E3, E1_3, N1a, N1b, N2_4, G1a, G1b]
    misc_ref: (9, C, 1)       [w_E1, b_E1, b_E2, b_E3, b_E1_3, b_N1, b_N2_4, b_G1, b_fc1-b_fc0]
    wfc_ref : (T, T//C)       block-diagonal class-difference FC weight (see wrapper)
    l1/2/3  : (C, T)          returned layers (folded layout)
    p_ref   : (1, 2, C, T//C) class probabilities for the FC rows of this tile
    """
    relu = lambda v: jnp.maximum(v, 0.0)
    f32 = jnp.float32

    x, xt = xs_ref[0:1, :], xs_ref[1:2, :]           # (1, T) each
    w_e1 = misc_ref[0]                               # (C, 1)

    # layer1 = E2E(relu(conv_E1(x))) = A + A^T; for a 1x1 conv A(x)^T == A(x^T), and
    # with Cin == 1 the conv is a VPU broadcast outer product (no K=1 MXU fill/drain).
    l1 = relu(w_e1 * x + misc_ref[1]) + relu(w_e1 * xt + misc_ref[1])

    def conv_relu(slot, a, bias_slot):
        z = jnp.dot(w_ref[slot], a, preferred_element_type=f32)
        return relu(z + misc_ref[bias_slot])

    # layer1 is spatially symmetric; 1x1 conv + bias + relu preserves symmetry, so for
    # every later layer E2E(y) == 2*y and E2N(y) == 2*y exactly.
    l2 = 2.0 * conv_relu(0, l1, 2)                   # E2E(E2(layer1))
    l3 = 2.0 * conv_relu(1, l2, 3)                   # E2E(E3(layer2))
    l4 = 2.0 * conv_relu(2, l1, 4)                   # E2E(E1_3(layer1))

    # torch.cat([layer3, layer4], ch) -> split-weight accumulation (no concat copy)
    z5 = (jnp.dot(w_ref[3], l3, preferred_element_type=f32)
          + jnp.dot(w_ref[4], l4, preferred_element_type=f32) + misc_ref[5])
    l5 = 2.0 * relu(z5)                              # E2N(N1(input_5))
    l6 = 2.0 * conv_relu(5, l2, 6)                   # E2N(N2_4(layer2))

    # torch.cat([layer5, layer6], ch) -> split-weight accumulation
    z7 = (jnp.dot(w_ref[6], l5, preferred_element_type=f32)
          + jnp.dot(w_ref[7], l6, preferred_element_type=f32) + misc_ref[7])
    l7 = relu(z7)                                    # G1(input_7); never leaves VMEM

    l1_ref[...] = l1.astype(l1_ref.dtype)
    l2_ref[...] = l2.astype(l2_ref.dtype)
    l3_ref[...] = l3.astype(l3_ref.dtype)

    # Fused FC + 2-class softmax.  layer7.view(-1, C) groups C consecutive lanes of one
    # channel row; the block-diagonal class-difference weight turns that literal
    # regrouping into one MXU matmul on the resident l7, and softmax over 2 classes is
    # sigmoid of the logit difference (single exp, no cross-lane reduction).
    zd = jnp.dot(l7, wfc_ref[...], preferred_element_type=f32) + misc_ref[8]  # (C, T//C)
    p1 = 1.0 / (1.0 + jnp.exp(-zd))
    p_ref[0, 1] = p1.astype(p_ref.dtype)
    p_ref[0, 0] = (1.0 - p1).astype(p_ref.dtype)


# ----------------------------- NetworkKDE forward ----------------------------

def _choose_num_lane_tiles(n_lanes, fc_group):
    """Lane-tile count for the folded (B*H*W) axis.

    >= 2 parallel grid steps keeps both v7x TensorCores busy; the cap bounds the
    per-step VMEM residency (live intermediates ~ sum(Cout)*4 B per lane) well under
    v7x's 64 MiB when scaling to realistic connectome sizes."""
    max_lanes_per_tile = 32 * 1024
    best = 1
    for nt in (2, 4, 8, 16, 32, 64, 128):
        if n_lanes % nt:
            continue
        t = n_lanes // nt
        if t % 128 or t % fc_group:
            continue
        best = nt
        if t <= max_lanes_per_tile:
            break
    return best


def network_kde_forward(params, x):
    """Mirrors NetworkKDE.forward (eval mode: dropout == identity).

    One fused pallas_call produces layer1/2/3 and the softmax output; layer4..7, both
    channel concats and the FC stay in VMEM."""
    B, Cin, H, W = x.shape
    assert Cin == 1, "NetworkKDE's first base_layer always has in_channels == 1"
    assert H == W, "E2E/E2N require square spatial maps"
    D = H * W
    N = B * D

    w_e1, b_e1 = params["E1"]
    w_e2, b_e2 = params["E2"]
    w_e3, b_e3 = params["E3"]
    w_e13, b_e13 = params["E1_3"]
    w_n1, b_n1 = params["N1"]
    w_n24, b_n24 = params["N2_4"]
    w_g1, b_g1 = params["G1"]
    w_fc, b_fc = params["FC"]

    C = w_e1.shape[0]
    # TODO(synk): heterogeneous per-layer channel counts (general NAS cells) need the
    # stacked weights zero-padded to max(Cout); uniform channel count is asserted here.
    assert all(w.shape[0] == C for w in (w_e2, w_e3, w_e13, w_n1, w_n24, w_g1))
    assert w_n1.shape[1] == 2 * C and w_g1.shape[1] == 2 * C
    assert w_fc.shape == (C, 2)
    assert D % C == 0, "layer7.view(-1, out_size) rows must not straddle channels"

    num_tiles = _choose_num_lane_tiles(N, C)
    T = N // num_tiles
    Gt = T // C                                      # FC rows handled per tile

    # ---- operand packing (collapses 17 tiny operands into 4) -------------------
    # Folded inputs: lane = b*D + h*W + w.  Row 1 is the spatially transposed image;
    # only the Cin==1 first layer needs it (all later transposes are fused away).
    xf = x.reshape(B, D)
    xtf = jnp.swapaxes(x, -1, -2).reshape(B, D)
    xs = jnp.stack([xf.reshape(N), xtf.reshape(N)], axis=0).astype(jnp.float32)

    # torch.cat consumers (N1, G1) -> split weights; stack all eight (C, C) weights.
    w_stack = jnp.stack([w_e2, w_e3, w_e13,
                         w_n1[:, :C], w_n1[:, C:], w_n24,
                         w_g1[:, :C], w_g1[:, C:]], axis=0).astype(jnp.float32)

    db_fc = b_fc[0, 1] - b_fc[0, 0]
    misc = jnp.stack([w_e1, b_e1, b_e2, b_e3, b_e13, b_n1, b_n24, b_g1,
                      jnp.zeros((C, 1), jnp.float32) + db_fc],
                     axis=0).astype(jnp.float32)

    # Block-diagonal class-difference FC weight: softmax([z0, z1]) == (1-s, s) with
    # s = sigmoid(z1 - z0), and z1 - z0 of each view(-1, C) row is one dot with
    # (w_fc[:,1] - w_fc[:,0]) placed block-diagonally over groups of C lanes.
    dw = (w_fc[:, 1] - w_fc[:, 0]).astype(jnp.float32)
    wfc = jnp.kron(jnp.eye(Gt, dtype=jnp.float32), dw.reshape(C, 1))     # (T, Gt)

    rep = lambda shape: pl.BlockSpec(shape, lambda i: (0,) * len(shape))

    l1f, l2f, l3f, pf = pl.pallas_call(
        fused_kde_kernel,
        out_shape=(jax.ShapeDtypeStruct((C, N), jnp.float32),
                   jax.ShapeDtypeStruct((C, N), jnp.float32),
                   jax.ShapeDtypeStruct((C, N), jnp.float32),
                   jax.ShapeDtypeStruct((num_tiles, 2, C, Gt), jnp.float32)),
        grid=(num_tiles,),
        in_specs=[pl.BlockSpec((2, T), lambda i: (0, i)),
                  rep(w_stack.shape), rep(misc.shape), rep(wfc.shape)],
        out_specs=(pl.BlockSpec((C, T), lambda i: (0, i)),
                   pl.BlockSpec((C, T), lambda i: (0, i)),
                   pl.BlockSpec((C, T), lambda i: (0, i)),
                   pl.BlockSpec((1, 2, C, Gt), lambda i: (i, 0, 0, 0))),
        compiler_params=pltpu.CompilerParams(dimension_semantics=("parallel",)),
        # TODO(synk): at realistic connectome sizes (D ~ 40k-160k) also set
        # vmem_limit_bytes and use bf16 matmul inputs (f32 accumulate) to halve
        # residency; _choose_num_lane_tiles already shrinks T for v7x's 64 MiB VMEM.
    )(xs, w_stack, misc, wfc)

    # Un-fold to the module's NCHW return layout (tiny XLA reshapes/transposes).
    layer1 = l1f.reshape(C, B, H, W).transpose(1, 0, 2, 3)
    layer2 = l2f.reshape(C, B, H, W).transpose(1, 0, 2, 3)
    layer3 = l3f.reshape(C, B, H, W).transpose(1, 0, 2, 3)

    # Reorder the per-tile probabilities into layer7.view(-1, out_size) row order:
    # row r = b*(H*W) + c*(D//C) + g  <->  p[tile, class, c, group-within-tile].
    Gd = D // C
    probs = pf.transpose(1, 2, 0, 3).reshape(2, C, B, Gd)       # [k, c, b, g]
    out = probs.transpose(2, 1, 3, 0).reshape(B * H * W, 2)     # [(b, c, g), k]
    return out, layer1, layer2, layer3


# ------------------- Literal (permute-based) pure-JAX reference ---------------

def _reference_forward(params, x):
    hi = jax.lax.Precision.HIGHEST

    def conv(p, a):
        w, b = p
        y = jnp.einsum('oc,bchw->bohw', w, a, precision=hi) + b.reshape(1, -1, 1, 1)
        return jnp.maximum(y, 0.0)

    E2E = lambda t: t + jnp.swapaxes(t, -1, -2)
    E2N = lambda t: jnp.swapaxes(t, -1, -2) * 2.0

    l1 = E2E(conv(params["E1"], x))
    l2 = E2E(conv(params["E2"], l1))
    l3 = E2E(conv(params["E3"], l2))
    l4 = E2E(conv(params["E1_3"], l1))
    in5 = jnp.concatenate([l3, l4], axis=1)
    l5 = E2N(conv(params["N1"], in5))
    l6 = E2N(conv(params["N2_4"], l2))
    in7 = jnp.concatenate([l5, l6], axis=1)
    l7 = conv(params["G1"], in7)
    out_size = l7.shape[1]
    flat = l7.reshape(-1, out_size)
    w_fc, b_fc = params["FC"]
    logits = jnp.dot(flat, w_fc, precision=hi) + b_fc
    return jax.nn.softmax(logits, axis=1), l1, l2, l3


# ----------------------------- Parameter init --------------------------------

def make_conv_params(key, cin, cout):
    kw, kb = jax.random.split(key)
    w = jax.random.normal(kw, (cout, cin), jnp.float32) * (1.0 / jnp.sqrt(cin))
    b = jax.random.normal(kb, (cout, 1), jnp.float32) * 0.01
    return w, b


def make_fc_params(key, cin, cout):
    kw, kb = jax.random.split(key)
    w = jax.random.normal(kw, (cin, cout), jnp.float32) * (1.0 / jnp.sqrt(cin))
    b = jax.random.normal(kb, (1, cout), jnp.float32) * 0.01
    return w, b


if __name__ == "__main__":
    # Small shapes: batch=2, spatial d=16, uniform per-layer channels = 8.
    B, d, C = 2, 16, 8

    root = jax.random.PRNGKey(0)
    keys = jax.random.split(root, 9)

    params = {
        "E1":   make_conv_params(keys[0], 1, C),
        "E2":   make_conv_params(keys[1], C, C),
        "E3":   make_conv_params(keys[2], C, C),
        "E1_3": make_conv_params(keys[3], C, C),
        "N1":   make_conv_params(keys[4], 2 * C, C),
        "N2_4": make_conv_params(keys[5], C, C),
        "G1":   make_conv_params(keys[6], 2 * C, C),
        "FC":   make_fc_params(keys[7], C, 2),   # OPS['fc2'] -> Linear(out_size, 2)
    }

    x = jax.random.normal(keys[8], (B, 1, d, d), jnp.float32)

    out, l1, l2, l3 = jax.jit(network_kde_forward)(params, x)
    jax.block_until_ready((out, l1, l2, l3))

    # Shape checks (identical semantics to the torch module's .view / returns).
    assert out.shape == (B * d * d, 2)
    assert l1.shape == (B, C, d, d)
    assert l2.shape == (B, C, d, d)
    assert l3.shape == (B, C, d, d)

    # Numerical check against a literal permute/concat reference.  Tolerance covers
    # worst-case multi-pass MXU f32 rounding through the 7 chained matmuls while being
    # orders of magnitude tighter than any real fusion/layout bug would produce.
    ref_out, ref_l1, ref_l2, ref_l3 = jax.jit(_reference_forward)(params, x)
    tol = dict(rtol=1e-3, atol=2e-3)
    assert jnp.allclose(l1, ref_l1, **tol), "layer1 mismatch"
    assert jnp.allclose(l2, ref_l2, **tol), "layer2 mismatch"
    assert jnp.allclose(l3, ref_l3, **tol), "layer3 mismatch"
    assert jnp.allclose(out, ref_out, **tol), "softmax output mismatch"

    print("KERNEL_OK")
</pallas_src>

<mosaic_0001>
module attributes {stable_mosaic.version = 11 : i64} {
  func.func @fused_kde_kernel(%arg0: i32, %arg1: memref<2x256xf32, #tpu.memory_space<vmem>>, %arg2: memref<8x8x8xf32, #tpu.memory_space<vmem>>, %arg3: memref<9x8x1xf32, #tpu.memory_space<vmem>>, %arg4: memref<256x32xf32, #tpu.memory_space<vmem>>, %arg5: memref<8x256xf32, #tpu.memory_space<vmem>>, %arg6: memref<8x256xf32, #tpu.memory_space<vmem>>, %arg7: memref<8x256xf32, #tpu.memory_space<vmem>>, %arg8: memref<1x2x8x32xf32, #tpu.memory_space<vmem>>) attributes {dimension_semantics = [#tpu.dimension_semantics<parallel>], iteration_bounds = array<i64: 2>, scalar_prefetch = 0 : i64, scratch_operands = 0 : i64, tpu.core_type = #tpu.core_type<tc>, window_params = [{transform_indices = @transform_0, window_bounds = array<i64: 2, 256>}, {pipeline_mode = #tpu.pipeline_mode<synchronous>, transform_indices = @transform_1, window_bounds = array<i64: 8, 8, 8>}, {pipeline_mode = #tpu.pipeline_mode<synchronous>, transform_indices = @transform_2, window_bounds = array<i64: 9, 8, 1>}, {pipeline_mode = #tpu.pipeline_mode<synchronous>, transform_indices = @transform_3, window_bounds = array<i64: 256, 32>}, {transform_indices = @transform_4, window_bounds = array<i64: 8, 256>}, {transform_indices = @transform_5, window_bounds = array<i64: 8, 256>}, {transform_indices = @transform_6, window_bounds = array<i64: 8, 256>}, {transform_indices = @transform_7, window_bounds = array<i64: 1, 2, 8, 32>}]} {
    %c0 = arith.constant 0 : index
    %c0_0 = arith.constant 0 : index
    %0 = vector.load %arg1[%c0, %c0_0] : memref<2x256xf32, #tpu.memory_space<vmem>>, vector<1x256xf32>
    %c1 = arith.constant 1 : index
    %c0_1 = arith.constant 0 : index
    %1 = vector.load %arg1[%c1, %c0_1] : memref<2x256xf32, #tpu.memory_space<vmem>>, vector<1x256xf32>
    %c0_2 = arith.constant 0 : index
    %c0_3 = arith.constant 0 : index
    %c0_4 = arith.constant 0 : index
    %2 = vector.load %arg3[%c0_2, %c0_3, %c0_4] : memref<9x8x1xf32, #tpu.memory_space<vmem>>, vector<1x8x1xf32>
    %3 = vector.shape_cast %2 : vector<1x8x1xf32> to vector<8x1xf32>
    %4 = vector.broadcast %3 : vector<8x1xf32> to vector<8x256xf32>
    %5 = vector.broadcast %0 : vector<1x256xf32> to vector<8x256xf32>
    %6 = arith.mulf %4, %5 : vector<8x256xf32>
    %c1_5 = arith.constant 1 : index
    %c0_6 = arith.constant 0 : index
    %c0_7 = arith.constant 0 : index
    %7 = vector.load %arg3[%c1_5, %c0_6, %c0_7] : memref<9x8x1xf32, #tpu.memory_space<vmem>>, vector<1x8x1xf32>
    %8 = vector.shape_cast %7 : vector<1x8x1xf32> to vector<8x1xf32>
    %9 = vector.broadcast %8 : vector<8x1xf32> to vector<8x256xf32>
    %10 = arith.addf %6, %9 : vector<8x256xf32>
    %cst = arith.constant 0.000000e+00 : f32
    %11 = vector.broadcast %cst : f32 to vector<8x256xf32>
    %12 = arith.maximumf %10, %11 : vector<8x256xf32>
    %13 = vector.broadcast %3 : vector<8x1xf32> to vector<8x256xf32>
    %14 = vector.broadcast %1 : vector<1x256xf32> to vector<8x256xf32>
    %15 = arith.mulf %13, %14 : vector<8x256xf32>
    %c1_8 = arith.constant 1 : index
    %c0_9 = arith.constant 0 : index
    %c0_10 = arith.constant 0 : index
    %16 = vector.load %arg3[%c1_8, %c0_9, %c0_10] : memref<9x8x1xf32, #tpu.memory_space<vmem>>, vector<1x8x1xf32>
    %17 = vector.shape_cast %16 : vector<1x8x1xf32> to vector<8x1xf32>
    %18 = vector.broadcast %17 : vector<8x1xf32> to vector<8x256xf32>
    %19 = arith.addf %15, %18 : vector<8x256xf32>
    %cst_11 = arith.constant 0.000000e+00 : f32
    %20 = vector.broadcast %cst_11 : f32 to vector<8x256xf32>
    %21 = arith.maximumf %19, %20 : vector<8x256xf32>
    %22 = arith.addf %12, %21 : vector<8x256xf32>
    %c0_12 = arith.constant 0 : index
    %c0_13 = arith.constant 0 : index
    %c0_14 = arith.constant 0 : index
    %23 = vector.load %arg2[%c0_12, %c0_13, %c0_14] : memref<8x8x8xf32, #tpu.memory_space<vmem>>, vector<1x8x8xf32>
    %24 = vector.shape_cast %23 : vector<1x8x8xf32> to vector<8x8xf32>
    %cst_15 = arith.constant dense<0.000000e+00> : vector<8x256xf32>
    %25 = tpu.matmul %24, %22, %cst_15 {dimension_numbers = #tpu.dot_dimension_numbers<[1], [0], [0], [1], [0, 0, 1, 1], [], []>} : vector<8x8xf32>, vector<8x256xf32>, vector<8x256xf32> -> vector<8x256xf32>
    %c2 = arith.constant 2 : index
    %c0_16 = arith.constant 0 : index
    %c0_17 = arith.constant 0 : index
    %26 = vector.load %arg3[%c2, %c0_16, %c0_17] : memref<9x8x1xf32, #tpu.memory_space<vmem>>, vector<1x8x1xf32>
    %27 = vector.shape_cast %26 : vector<1x8x1xf32> to vector<8x1xf32>
    %28 = vector.broadcast %27 : vector<8x1xf32> to vector<8x256xf32>
    %29 = arith.addf %25, %28 : vector<8x256xf32>
    %cst_18 = arith.constant 0.000000e+00 : f32
    %30 = vector.broadcast %cst_18 : f32 to vector<8x256xf32>
    %31 = arith.maximumf %29, %30 : vector<8x256xf32>
    %cst_19 = arith.constant 2.000000e+00 : f32
    %32 = vector.broadcast %cst_19 : f32 to vector<8x256xf32>
    %33 = arith.mulf %32, %31 : vector<8x256xf32>
    %c1_20 = arith.constant 1 : index
    %c0_21 = arith.constant 0 : index
    %c0_22 = arith.constant 0 : index
    %34 = vector.load %arg2[%c1_20, %c0_21, %c0_22] : memref<8x8x8xf32, #tpu.memory_space<vmem>>, vector<1x8x8xf32>
    %35 = vector.shape_cast %34 : vector<1x8x8xf32> to vector<8x8xf32>
    %cst_23 = arith.constant dense<0.000000e+00> : vector<8x256xf32>
    %36 = tpu.matmul %35, %33, %cst_23 {dimension_numbers = #tpu.dot_dimension_numbers<[1], [0], [0], [1], [0, 0, 1, 1], [], []>} : vector<8x8xf32>, vector<8x256xf32>, vector<8x256xf32> -> vector<8x256xf32>
    %c3 = arith.constant 3 : index
    %c0_24 = arith.constant 0 : index
    %c0_25 = arith.constant 0 : index
    %37 = vector.load %arg3[%c3, %c0_24, %c0_25] : memref<9x8x1xf32, #tpu.memory_space<vmem>>, vector<1x8x1xf32>
    %38 = vector.shape_cast %37 : vector<1x8x1xf32> to vector<8x1xf32>
    %39 = vector.broadcast %38 : vector<8x1xf32> to vector<8x256xf32>
    %40 = arith.addf %36, %39 : vector<8x256xf32>
    %cst_26 = arith.constant 0.000000e+00 : f32
    %41 = vector.broadcast %cst_26 : f32 to vector<8x256xf32>
    %42 = arith.maximumf %40, %41 : vector<8x256xf32>
    %cst_27 = arith.constant 2.000000e+00 : f32
    %43 = vector.broadcast %cst_27 : f32 to vector<8x256xf32>
    %44 = arith.mulf %43, %42 : vector<8x256xf32>
    %c2_28 = arith.constant 2 : index
    %c0_29 = arith.constant 0 : index
    %c0_30 = arith.constant 0 : index
    %45 = vector.load %arg2[%c2_28, %c0_29, %c0_30] : memref<8x8x8xf32, #tpu.memory_space<vmem>>, vector<1x8x8xf32>
    %46 = vector.shape_cast %45 : vector<1x8x8xf32> to vector<8x8xf32>
    %cst_31 = arith.constant dense<0.000000e+00> : vector<8x256xf32>
    %47 = tpu.matmul %46, %22, %cst_31 {dimension_numbers = #tpu.dot_dimension_numbers<[1], [0], [0], [1], [0, 0, 1, 1], [], []>} : vector<8x8xf32>, vector<8x256xf32>, vector<8x256xf32> -> vector<8x256xf32>
    %c4 = arith.constant 4 : index
    %c0_32 = arith.constant 0 : index
    %c0_33 = arith.constant 0 : index
    %48 = vector.load %arg3[%c4, %c0_32, %c0_33] : memref<9x8x1xf32, #tpu.memory_space<vmem>>, vector<1x8x1xf32>
    %49 = vector.shape_cast %48 : vector<1x8x1xf32> to vector<8x1xf32>
    %50 = vector.broadcast %49 : vector<8x1xf32> to vector<8x256xf32>
    %51 = arith.addf %47, %50 : vector<8x256xf32>
    %cst_34 = arith.constant 0.000000e+00 : f32
    %52 = vector.broadcast %cst_34 : f32 to vector<8x256xf32>
    %53 = arith.maximumf %51, %52 : vector<8x256xf32>
    %cst_35 = arith.constant 2.000000e+00 : f32
    %54 = vector.broadcast %cst_35 : f32 to vector<8x256xf32>
    %55 = arith.mulf %54, %53 : vector<8x256xf32>
    %c3_36 = arith.constant 3 : index
    %c0_37 = arith.constant 0 : index
    %c0_38 = arith.constant 0 : index
    %56 = vector.load %arg2[%c3_36, %c0_37, %c0_38] : memref<8x8x8xf32, #tpu.memory_space<vmem>>, vector<1x8x8xf32>
    %57 = vector.shape_cast %56 : vector<1x8x8xf32> to vector<8x8xf32>
    %cst_39 = arith.constant dense<0.000000e+00> : vector<8x256xf32>
    %58 = tpu.matmul %57, %44, %cst_39 {dimension_numbers = #tpu.dot_dimension_numbers<[1], [0], [0], [1], [0, 0, 1, 1], [], []>} : vector<8x8xf32>, vector<8x256xf32>, vector<8x256xf32> -> vector<8x256xf32>
    %c4_40 = arith.constant 4 : index
    %c0_41 = arith.constant 0 : index
    %c0_42 = arith.constant 0 : index
    %59 = vector.load %arg2[%c4_40, %c0_41, %c0_42] : memref<8x8x8xf32, #tpu.memory_space<vmem>>, vector<1x8x8xf32>
    %60 = vector.shape_cast %59 : vector<1x8x8xf32> to vector<8x8xf32>
    %cst_43 = arith.constant dense<0.000000e+00> : vector<8x256xf32>
    %61 = tpu.matmul %60, %55, %cst_43 {dimension_numbers = #tpu.dot_dimension_numbers<[1], [0], [0], [1], [0, 0, 1, 1], [], []>} : vector<8x8xf32>, vector<8x256xf32>, vector<8x256xf32> -> vector<8x256xf32>
    %62 = arith.addf %58, %61 : vector<8x256xf32>
    %c5 = arith.constant 5 : index
    %c0_44 = arith.constant 0 : index
    %c0_45 = arith.constant 0 : index
    %63 = vector.load %arg3[%c5, %c0_44, %c0_45] : memref<9x8x1xf32, #tpu.memory_space<vmem>>, vector<1x8x1xf32>
    %64 = vector.shape_cast %63 : vector<1x8x1xf32> to vector<8x1xf32>
    %65 = vector.broadcast %64 : vector<8x1xf32> to vector<8x256xf32>
    %66 = arith.addf %62, %65 : vector<8x256xf32>
    %cst_46 = arith.constant 0.000000e+00 : f32
    %67 = vector.broadcast %cst_46 : f32 to vector<8x256xf32>
    %68 = arith.maximumf %66, %67 : vector<8x256xf32>
    %cst_47 = arith.constant 2.000000e+00 : f32
    %69 = vector.broadcast %cst_47 : f32 to vector<8x256xf32>
    %70 = arith.mulf %69, %68 : vector<8x256xf32>
    %c5_48 = arith.constant 5 : index
    %c0_49 = arith.constant 0 : index
    %c0_50 = arith.constant 0 : index
    %71 = vector.load %arg2[%c5_48, %c0_49, %c0_50] : memref<8x8x8xf32, #tpu.memory_space<vmem>>, vector<1x8x8xf32>
    %72 = vector.shape_cast %71 : vector<1x8x8xf32> to vector<8x8xf32>
    %cst_51 = arith.constant dense<0.000000e+00> : vector<8x256xf32>
    %73 = tpu.matmul %72, %33, %cst_51 {dimension_numbers = #tpu.dot_dimension_numbers<[1], [0], [0], [1], [0, 0, 1, 1], [], []>} : vector<8x8xf32>, vector<8x256xf32>, vector<8x256xf32> -> vector<8x256xf32>
    %c6 = arith.constant 6 : index
    %c0_52 = arith.constant 0 : index
    %c0_53 = arith.constant 0 : index
    %74 = vector.load %arg3[%c6, %c0_52, %c0_53] : memref<9x8x1xf32, #tpu.memory_space<vmem>>, vector<1x8x1xf32>
    %75 = vector.shape_cast %74 : vector<1x8x1xf32> to vector<8x1xf32>
    %76 = vector.broadcast %75 : vector<8x1xf32> to vector<8x256xf32>
    %77 = arith.addf %73, %76 : vector<8x256xf32>
    %cst_54 = arith.constant 0.000000e+00 : f32
    %78 = vector.broadcast %cst_54 : f32 to vector<8x256xf32>
    %79 = arith.maximumf %77, %78 : vector<8x256xf32>
    %cst_55 = arith.constant 2.000000e+00 : f32
    %80 = vector.broadcast %cst_55 : f32 to vector<8x256xf32>
    %81 = arith.mulf %80, %79 : vector<8x256xf32>
    %c6_56 = arith.constant 6 : index
    %c0_57 = arith.constant 0 : index
    %c0_58 = arith.constant 0 : index
    %82 = vector.load %arg2[%c6_56, %c0_57, %c0_58] : memref<8x8x8xf32, #tpu.memory_space<vmem>>, vector<1x8x8xf32>
    %83 = vector.shape_cast %82 : vector<1x8x8xf32> to vector<8x8xf32>
    %cst_59 = arith.constant dense<0.000000e+00> : vector<8x256xf32>
    %84 = tpu.matmul %83, %70, %cst_59 {dimension_numbers = #tpu.dot_dimension_numbers<[1], [0], [0], [1], [0, 0, 1, 1], [], []>} : vector<8x8xf32>, vector<8x256xf32>, vector<8x256xf32> -> vector<8x256xf32>
    %c7 = arith.constant 7 : index
    %c0_60 = arith.constant 0 : index
    %c0_61 = arith.constant 0 : index
    %85 = vector.load %arg2[%c7, %c0_60, %c0_61] : memref<8x8x8xf32, #tpu.memory_space<vmem>>, vector<1x8x8xf32>
    %86 = vector.shape_cast %85 : vector<1x8x8xf32> to vector<8x8xf32>
    %cst_62 = arith.constant dense<0.000000e+00> : vector<8x256xf32>
    %87 = tpu.matmul %86, %81, %cst_62 {dimension_numbers = #tpu.dot_dimension_numbers<[1], [0], [0], [1], [0, 0, 1, 1], [], []>} : vector<8x8xf32>, vector<8x256xf32>, vector<8x256xf32> -> vector<8x256xf32>
    %88 = arith.addf %84, %87 : vector<8x256xf32>
    %c7_63 = arith.constant 7 : index
    %c0_64 = arith.constant 0 : index
    %c0_65 = arith.constant 0 : index
    %89 = vector.load %arg3[%c7_63, %c0_64, %c0_65] : memref<9x8x1xf32, #tpu.memory_space<vmem>>, vector<1x8x1xf32>
    %90 = vector.shape_cast %89 : vector<1x8x1xf32> to vector<8x1xf32>
    %91 = vector.broadcast %90 : vector<8x1xf32> to vector<8x256xf32>
    %92 = arith.addf %88, %91 : vector<8x256xf32>
    %cst_66 = arith.constant 0.000000e+00 : f32
    %93 = vector.broadcast %cst_66 : f32 to vector<8x256xf32>
    %94 = arith.maximumf %92, %93 : vector<8x256xf32>
    %c0_67 = arith.constant 0 : index
    %c0_68 = arith.constant 0 : index
    %95 = vector.load %arg5[%c0_67, %c0_68] : memref<8x256xf32, #tpu.memory_space<vmem>>, vector<8x256xf32>
    tpu.vector_store %arg5[%c0_67, %c0_68], %22 {strides = array<i32>} : memref<8x256xf32, #tpu.memory_space<vmem>>, vector<8x256xf32>,
    %c0_69 = arith.constant 0 : index
    %c0_70 = arith.constant 0 : index
    %96 = vector.load %arg6[%c0_69, %c0_70] : memref<8x256xf32, #tpu.memory_space<vmem>>, vector<8x256xf32>
    tpu.vector_store %arg6[%c0_69, %c0_70], %33 {strides = array<i32>} : memref<8x256xf32, #tpu.memory_space<vmem>>, vector<8x256xf32>,
    %c0_71 = arith.constant 0 : index
    %c0_72 = arith.constant 0 : index
    %97 = vector.load %arg7[%c0_71, %c0_72] : memref<8x256xf32, #tpu.memory_space<vmem>>, vector<8x256xf32>
    tpu.vector_store %arg7[%c0_71, %c0_72], %44 {strides = array<i32>} : memref<8x256xf32, #tpu.memory_space<vmem>>, vector<8x256xf32>,
    %c0_73 = arith.constant 0 : index
    %c0_74 = arith.constant 0 : index
    %98 = vector.load %arg4[%c0_73, %c0_74] : memref<256x32xf32, #tpu.memory_space<vmem>>, vector<256x32xf32>
    %cst_75 = arith.constant dense<0.000000e+00> : vector<8x32xf32>
    %99 = tpu.matmul %94, %98, %cst_75 {dimension_numbers = #tpu.dot_dimension_numbers<[1], [0], [0], [1], [0, 0, 1, 1], [], []>} : vector<8x256xf32>, vector<256x32xf32>, vector<8x32xf32> -> vector<8x32xf32>
    %c8 = arith.constant 8 : index
    %c0_76 = arith.constant 0 : index
    %c0_77 = arith.constant 0 : index
    %100 = vector.load %arg3[%c8, %c0_76, %c0_77] : memref<9x8x1xf32, #tpu.memory_space<vmem>>, vector<1x8x1xf32>
    %101 = vector.shape_cast %100 : vector<1x8x1xf32> to vector<8x1xf32>
    %102 = vector.broadcast %101 : vector<8x1xf32> to vector<8x32xf32>
    %103 = arith.addf %99, %102 : vector<8x32xf32>
    %cst_78 = arith.constant 0.000000e+00 : f32
    %104 = vector.broadcast %cst_78 : f32 to vector<8x32xf32>
    %105 = arith.subf %104, %103 : vector<8x32xf32>
    %106 = math.exp %105 : vector<8x32xf32>
    %cst_79 = arith.constant 1.000000e+00 : f32
    %107 = vector.broadcast %cst_79 : f32 to vector<8x32xf32>
    %108 = arith.addf %107, %106 : vector<8x32xf32>
    %cst_80 = arith.constant 1.000000e+00 : f32
    %109 = vector.broadcast %cst_80 : f32 to vector<8x32xf32>
    %110 = arith.divf %109, %108 : vector<8x32xf32>
    %c0_81 = arith.constant 0 : index
    %c1_82 = arith.constant 1 : index
    %c0_83 = arith.constant 0 : index
    %c0_84 = arith.constant 0 : index
    %111 = vector.load %arg8[%c0_81, %c1_82, %c0_83, %c0_84] : memref<1x2x8x32xf32, #tpu.memory_space<vmem>>, vector<1x1x8x32xf32>
    %112 = vector.shape_cast %111 : vector<1x1x8x32xf32> to vector<8x32xf32>
    %113 = vector.shape_cast %110 : vector<8x32xf32> to vector<1x1x8x32xf32>
    tpu.vector_store %arg8[%c0_81, %c1_82, %c0_83, %c0_84], %113 {strides = array<i32>} : memref<1x2x8x32xf32, #tpu.memory_space<vmem>>, vector<1x1x8x32xf32>,
    %cst_85 = arith.constant 1.000000e+00 : f32
    %114 = vector.broadcast %cst_85 : f32 to vector<8x32xf32>
    %115 = arith.subf %114, %110 : vector<8x32xf32>
    %c0_86 = arith.constant 0 : index
    %c0_87 = arith.constant 0 : index
    %c0_88 = arith.constant 0 : index
    %c0_89 = arith.constant 0 : index
    %116 = vector.load %arg8[%c0_86, %c0_87, %c0_88, %c0_89] : memref<1x2x8x32xf32, #tpu.memory_space<vmem>>, vector<1x1x8x32xf32>
    %117 = vector.shape_cast %116 : vector<1x1x8x32xf32> to vector<8x32xf32>
    %118 = vector.shape_cast %115 : vector<8x32xf32> to vector<1x1x8x32xf32>
    tpu.vector_store %arg8[%c0_86, %c0_87, %c0_88, %c0_89], %118 {strides = array<i32>} : memref<1x2x8x32xf32, #tpu.memory_space<vmem>>, vector<1x1x8x32xf32>,
    return
  }
  func.func @transform_0(%arg0: i32) -> (i32, i32) {
    %c0_i32 = arith.constant 0 : i32
    %c0_i32_0 = arith.constant 0 : i32
    return %c0_i32, %arg0 : i32, i32
  }
  func.func @transform_1(%arg0: i32) -> (i32, i32, i32) {
    %c0_i32 = arith.constant 0 : i32
    %c0_i32_0 = arith.constant 0 : i32
    %c0_i32_1 = arith.constant 0 : i32
    %c0_i32_2 = arith.constant 0 : i32
    return %c0_i32, %c0_i32_0, %c0_i32_1 : i32, i32, i32
  }
  func.func @transform_2(%arg0: i32) -> (i32, i32, i32) {
    %c0_i32 = arith.constant 0 : i32
    %c0_i32_0 = arith.constant 0 : i32
    %c0_i32_1 = arith.constant 0 : i32
    %c0_i32_2 = arith.constant 0 : i32
    return %c0_i32, %c0_i32_0, %c0_i32_1 : i32, i32, i32
  }
  func.func @transform_3(%arg0: i32) -> (i32, i32) {
    %c0_i32 = arith.constant 0 : i32
    %c0_i32_0 = arith.constant 0 : i32
    %c0_i32_1 = arith.constant 0 : i32
    return %c0_i32, %c0_i32_0 : i32, i32
  }
  func.func @transform_4(%arg0: i32) -> (i32, i32) {
    %c0_i32 = arith.constant 0 : i32
    %c0_i32_0 = arith.constant 0 : i32
    return %c0_i32, %arg0 : i32, i32
  }
  func.func @transform_5(%arg0: i32) -> (i32, i32) {
    %c0_i32 = arith.constant 0 : i32
    %c0_i32_0 = arith.constant 0 : i32
    return %c0_i32, %arg0 : i32, i32
  }
  func.func @transform_6(%arg0: i32) -> (i32, i32) {
    %c0_i32 = arith.constant 0 : i32
    %c0_i32_0 = arith.constant 0 : i32
    return %c0_i32, %arg0 : i32, i32
  }
  func.func @transform_7(%arg0: i32) -> (i32, i32, i32, i32) {
    %c0_i32 = arith.constant 0 : i32
    %c0_i32_0 = arith.constant 0 : i32
    %c0_i32_1 = arith.constant 0 : i32
    %c0_i32_2 = arith.constant 0 : i32
    return %arg0, %c0_i32, %c0_i32_0, %c0_i32_1 : i32, i32, i32, i32
  }
}

</mosaic_0001>

<llo_original>
// kernel: network_kde_forward.1
$region0: #{network_kde_forward.1}
  #allocation0 [shape = 'u32[]', space=smem, size = 0x4, offset = 0x4, fixed_abs, tag = 'smem constant byte address 0x4 - core index']
  #allocation1 [shape = 'u32[144,128]{1,0:T(1,128)}', space=vmem, size = 0x12000, scoped, tag = 'internal scratch']
  %s0 = inlined_call_operand.vmem [shape: f32[2,512], index: 0, kind: input, shape index: {}]
  %s1 = inlined_call_operand.vmem [shape: f32[8,8,8], index: 1, kind: input, shape index: {}]
  %s2 = inlined_call_operand.vmem [shape: f32[9,8,1], index: 2, kind: input, shape index: {}]
  %s3 = inlined_call_operand.vmem [shape: f32[256,32], index: 3, kind: input, shape index: {}]
  %s4 = inlined_call_operand.vmem [shape: f32[8,512], index: 4, kind: output, shape index: {0}]
  %s5 = inlined_call_operand.vmem [shape: f32[8,512], index: 5, kind: output, shape index: {1}]
  %s6 = inlined_call_operand.vmem [shape: f32[8,512], index: 6, kind: output, shape index: {2}]
  %s7 = inlined_call_operand.vmem [shape: f32[2,2,8,32], index: 7, kind: output, shape index: {3}]
  %8 = xla_tuple %s4, %s5, %s6, %s7
  %s9 = sld [smem:[#allocation0]]
  $region73: #{network_kde_forward.1} parent=0
    _
  %s11 = ssub.s32 1, %s9
  %s12 = scalar_select 0, %s11, %s9
  loop: start=0, step=1, limit=4
  $region2: #{network_kde_forward.1} parent=0 // loop_pre_header
    _
  $region3: #{network_kde_forward.1} parent=0 // loop_header
    %s14 = sphi 0, %s18
    %p15 = scmp.ge.s32.totalorder %s14, 4
    %s24 = sphi 0, %s26
    %s27 = sphi 0, %s24
    %s28 = sphi 0, %s27
    %s44 = sphi 0, %s28
    %s48 = sphi 0, %s48
    %s50 = sphi 0, %s48
    %s51 = sphi 0, %s50
    %s65 = sphi 0, %s51
    %s69 = sphi 0, %s69
    %s71 = sphi 0, %s69
    %s72 = sphi 0, %s71
    %s86 = sphi 0, %s72
    %s90 = sphi 0, %s90
    %s92 = sphi 0, %s90
    %s93 = sphi 0, %s92
    %s107 = sphi 0, %s93
    %s113 = sphi 0, %s115
    %s116 = sphi 0, %s113
    %s117 = sphi 0, %s116
    %s133 = sphi 0, %s117
    %s139 = sphi 0, %s141
    %s142 = sphi 0, %s139
    %s143 = sphi 0, %s142
    %s159 = sphi 0, %s143
    %s165 = sphi 0, %s167
    %s168 = sphi 0, %s165
    %s169 = sphi 0, %s168
    %s185 = sphi 0, %s169
    %s191 = sphi 0, %s193
    %s194 = sphi 0, %s191
    %s195 = sphi 0, %s194
    %s211 = sphi 0, %s195
  $region4: #{network_kde_forward.1} parent=0 // loop_header_branch
    %17 = sbr.rel (%p15) target = $region8
  $region5: #{network_kde_forward.1} parent=0 // loop_body
    %s19 = ssub.s32 %s14, 1
    %s20 = ssub.s32 %s14, 2
    %s21 = sadd.s32 %s14, 1
    %s22 = ssub.s32 %s14, %s21
    %p23 = scmp.eq.s32.totalorder %s22, 0
    %s25 = sadd.s32 %s24, 1
    %s26 = scalar_select %p23, %s24, %s25
    %p29 = pneg %p23
    %p30 = scmp.eq.s32.totalorder %s14, 1
    %p31 = por %p29, %p30
    %p32 = scmp.ne.s32.totalorder %s24, %s27
    %p33 = scmp.eq.s32.totalorder %s14, 0
    %p34 = por %p32, %p33
    %p35 = scmp.ne.s32.totalorder %s24, %s27
    %p36 = scmp.eq.s32.totalorder %s19, 1
    %p37 = por %p35, %p36
    %p38 = scmp.ne.s32.totalorder %s27, %s28
    %p39 = scmp.eq.s32.totalorder %s19, 0
    %p40 = por %p38, %p39
    %p41 = scmp.ne.s32.totalorder %s27, %s28
    %p42 = scmp.eq.s32.totalorder %s20, 1
    %p43 = por %p41, %p42
    %p45 = scmp.ne.s32.totalorder %s28, %s44
    %p46 = scmp.eq.s32.totalorder %s20, 0
    %p47 = por %p45, %p46
    %s49 = sadd.s32 %s48, 1
    %p52 = scmp.eq.s32.totalorder %s14, 1
    %p53 = scmp.ne.s32.totalorder %s48, %s50
    %p54 = scmp.eq.s32.totalorder %s14, 0
    %p55 = por %p53, %p54
    %p56 = scmp.ne.s32.totalorder %s48, %s50
    %p57 = scmp.eq.s32.totalorder %s19, 1
    %p58 = por %p56, %p57
    %p59 = scmp.ne.s32.totalorder %s50, %s51
    %p60 = scmp.eq.s32.totalorder %s19, 0
    %p61 = por %p59, %p60
    %p62 = scmp.ne.s32.totalorder %s50, %s51
    %p63 = scmp.eq.s32.totalorder %s20, 1
    %p64 = por %p62, %p63
    %p66 = scmp.ne.s32.totalorder %s51, %s65
    %p67 = scmp.eq.s32.totalorder %s20, 0
    %p68 = por %p66, %p67
    %s70 = sadd.s32 %s69, 1
    %p73 = scmp.eq.s32.totalorder %s14, 1
    %p74 = scmp.ne.s32.totalorder %s69, %s71
    %p75 = scmp.eq.s32.totalorder %s14, 0
    %p76 = por %p74, %p75
    %p77 = scmp.ne.s32.totalorder %s69, %s71
    %p78 = scmp.eq.s32.totalorder %s19, 1
    %p79 = por %p77, %p78
    %p80 = scmp.ne.s32.totalorder %s71, %s72
    %p81 = scmp.eq.s32.totalorder %s19, 0
    %p82 = por %p80, %p81
    %p83 = scmp.ne.s32.totalorder %s71, %s72
    %p84 = scmp.eq.s32.totalorder %s20, 1
    %p85 = por %p83, %p84
    %p87 = scmp.ne.s32.totalorder %s72, %s86
    %p88 = scmp.eq.s32.totalorder %s20, 0
    %p89 = por %p87, %p88
    %s91 = sadd.s32 %s90, 1
    %p94 = scmp.eq.s32.totalorder %s14, 1
    %p95 = scmp.ne.s32.totalorder %s90, %s92
    %p96 = scmp.eq.s32.totalorder %s14, 0
    %p97 = por %p95, %p96
    %p98 = scmp.ne.s32.totalorder %s90, %s92
    %p99 = scmp.eq.s32.totalorder %s19, 1
    %p100 = por %p98, %p99
    %p101 = scmp.ne.s32.totalorder %s92, %s93
    %p102 = scmp.eq.s32.totalorder %s19, 0
    %p103 = por %p101, %p102
    %p104 = scmp.ne.s32.totalorder %s92, %s93
    %p105 = scmp.eq.s32.totalorder %s20, 1
    %p106 = por %p104, %p105
    %p108 = scmp.ne.s32.totalorder %s93, %s107
    %p109 = scmp.eq.s32.totalorder %s20, 0
    %p110 = por %p108, %p109
    %s111 = ssub.s32 %s14, %s21
    %p112 = scmp.eq.s32.totalorder %s111, 0
    %s114 = sadd.s32 %s113, 1
    %s115 = scalar_select %p112, %s113, %s114
    %p118 = pneg %p112
    %p119 = scmp.eq.s32.totalorder %s14, 1
    %p120 = por %p118, %p119
    %p121 = scmp.ne.s32.totalorder %s113, %s116
    %p122 = scmp.eq.s32.totalorder %s14, 0
    %p123 = por %p121, %p122
    %p124 = scmp.ne.s32.totalorder %s113, %s116
    %p125 = scmp.eq.s32.totalorder %s19, 1
    %p126 = por %p124, %p125
    %p127 = scmp.ne.s32.totalorder %s116, %s117
    %p128 = scmp.eq.s32.totalorder %s19, 0
    %p129 = por %p127, %p128
    %p130 = scmp.ne.s32.totalorder %s116, %s117
    %p131 = scmp.eq.s32.totalorder %s20, 1
    %p132 = por %p130, %p131
    %p134 = scmp.ne.s32.totalorder %s117, %s133
    %p135 = scmp.eq.s32.totalorder %s20, 0
    %p136 = por %p134, %p135
    %s137 = ssub.s32 %s14, %s21
    %p138 = scmp.eq.s32.totalorder %s137, 0
    %s140 = sadd.s32 %s139, 1
    %s141 = scalar_select %p138, %s139, %s140
    %p144 = pneg %p138
    %p145 = scmp.eq.s32.totalorder %s14, 1
    %p146 = por %p144, %p145
    %p147 = scmp.ne.s32.totalorder %s139, %s142
    %p148 = scmp.eq.s32.totalorder %s14, 0
    %p149 = por %p147, %p148
    %p150 = scmp.ne.s32.totalorder %s139, %s142
    %p151 = scmp.eq.s32.totalorder %s19, 1
    %p152 = por %p150, %p151
    %p153 = scmp.ne.s32.totalorder %s142, %s143
    %p154 = scmp.eq.s32.totalorder %s19, 0
    %p155 = por %p153, %p154
    %p156 = scmp.ne.s32.totalorder %s142, %s143
    %p157 = scmp.eq.s32.totalorder %s20, 1
    %p158 = por %p156, %p157
    %p160 = scmp.ne.s32.totalorder %s143, %s159
    %p161 = scmp.eq.s32.totalorder %s20, 0
    %p162 = por %p160, %p161
    %s163 = ssub.s32 %s14, %s21
    %p164 = scmp.eq.s32.totalorder %s163, 0
    %s166 = sadd.s32 %s165, 1
    %s167 = scalar_select %p164, %s165, %s166
    %p170 = pneg %p164
    %p171 = scmp.eq.s32.totalorder %s14, 1
    %p172 = por %p170, %p171
    %p173 = scmp.ne.s32.totalorder %s165, %s168
    %p174 = scmp.eq.s32.totalorder %s14, 0
    %p175 = por %p173, %p174
    %p176 = scmp.ne.s32.totalorder %s165, %s168
    %p177 = scmp.eq.s32.totalorder %s19, 1
    %p178 = por %p176, %p177
    %p179 = scmp.ne.s32.totalorder %s168, %s169
    %p180 = scmp.eq.s32.totalorder %s19, 0
    %p181 = por %p179, %p180
    %p182 = scmp.ne.s32.totalorder %s168, %s169
    %p183 = scmp.eq.s32.totalorder %s20, 1
    %p184 = por %p182, %p183
    %p186 = scmp.ne.s32.totalorder %s169, %s185
    %p187 = scmp.eq.s32.totalorder %s20, 0
    %p188 = por %p186, %p187
    %s189 = ssub.s32 %s14, %s21
    %p190 = scmp.eq.s32.totalorder %s189, 0
    %s192 = sadd.s32 %s191, 1
    %s193 = scalar_select %p190, %s191, %s192
    %p196 = pneg %p190
    %p197 = scmp.eq.s32.totalorder %s14, 1
    %p198 = por %p196, %p197
    %p199 = scmp.ne.s32.totalorder %s191, %s194
    %p200 = scmp.eq.s32.totalorder %s14, 0
    %p201 = por %p199, %p200
    %p202 = scmp.ne.s32.totalorder %s191, %s194
    %p203 = scmp.eq.s32.totalorder %s19, 1
    %p204 = por %p202, %p203
    %p205 = scmp.ne.s32.totalorder %s194, %s195
    %p206 = scmp.eq.s32.totalorder %s19, 0
    %p207 = por %p205, %p206
    %p208 = scmp.ne.s32.totalorder %s194, %s195
    %p209 = scmp.eq.s32.totalorder %s20, 1
    %p210 = por %p208, %p209
    %p212 = scmp.ne.s32.totalorder %s195, %s211
    %p213 = scmp.eq.s32.totalorder %s20, 0
    %p214 = por %p212, %p213
    %p215 = scmp.le.s32.totalorder 1, %s14
    %p216 = scmp.lt.s32.totalorder %s14, 3
    %p217 = pnand %p215, %p216
    %p218 = pneg %p217
    // Predicated region
    $region9: #{network_kde_forward.1} parent=5 // pred_check
      _
    $region10: #{network_kde_forward.1} parent=5 // pred_check_branch
      %220 = sbr.rel (%p217) target = $region12
    $region11: #{network_kde_forward.1} parent=5 // pred_region
      %s221 = ssub.s32 %s14, 1
      // Predicated region
      $region13: #{network_kde_forward.1} parent=11 // pred_check
        %p222 = pneg %p61
      $region14: #{network_kde_forward.1} parent=11 // pred_check_branch
        %224 = sbr.rel (%p222) target = $region16
      $region15: #{network_kde_forward.1} parent=11 // pred_region
        _
      $region16: #{network_kde_forward.1} parent=11 // pred_fallthru
        _
      // Predicated region
      $region17: #{network_kde_forward.1} parent=11 // pred_check
        %p225 = pneg %p82
      $region18: #{network_kde_forward.1} parent=11 // pred_check_branch
        %227 = sbr.rel (%p225) target = $region20
      $region19: #{network_kde_forward.1} parent=11 // pred_region
        _
      $region20: #{network_kde_forward.1} parent=11 // pred_fallthru
        _
      // Predicated region
      $region21: #{network_kde_forward.1} parent=11 // pred_check
        %p228 = pneg %p103
      $region22: #{network_kde_forward.1} parent=11 // pred_check_branch
        %230 = sbr.rel (%p228) target = $region24
      $region23: #{network_kde_forward.1} parent=11 // pred_region
        _
      $region24: #{network_kde_forward.1} parent=11 // pred_fallthru
        _
    $region12: #{network_kde_forward.1} parent=5 // pred_fallthru
      _
    %p231 = scmp.lt.s32.totalorder %s14, 2
    // Predicated region
    $region25: #{network_kde_forward.1} parent=5 // pred_check
      %p232 = pneg %p231
    $region26: #{network_kde_forward.1} parent=5 // pred_check_branch
      %234 = sbr.rel (%p232) target = $region28
    $region27: #{network_kde_forward.1} parent=5 // pred_region
      // Predicated region
      $region29: #{network_kde_forward.1} parent=27 // pred_check
        %p235 = pneg %p34
      $region30: #{network_kde_forward.1} parent=27 // pred_check_branch
        %237 = sbr.rel (%p235) target = $region32
      $region31: #{network_kde_forward.1} parent=27 // pred_region
        %s238 = smul.u32 2, %s14
        %p239 = scmp.lt.s32.totalorder %s238, 3
        %s240 = scalar_select %p239, %s238, 3
        %s241 = smul.addr %s240, 2
        %s242 = scalar_lea.vmem %s0, %s241
        %s243 = smul.u32 2, %s14
      $region32: #{network_kde_forward.1} parent=27 // pred_fallthru
        _
    $region28: #{network_kde_forward.1} parent=5 // pred_fallthru
      _
    %p244 = scmp.le.s32.totalorder 1, %s14
    %p245 = scmp.lt.s32.totalorder %s14, 3
    %p246 = pnand %p244, %p245
    %p247 = pneg %p246
    // Predicated region
    $region33: #{network_kde_forward.1} parent=5 // pred_check
      _
    $region34: #{network_kde_forward.1} parent=5 // pred_check_branch
      %249 = sbr.rel (%p246) target = $region36
    $region35: #{network_kde_forward.1} parent=5 // pred_region
      %s250 = ssub.s32 %s14, 1
      %s251 = smul.u32 2, %s19
      %p252 = scmp.lt.s32.totalorder %s251, 3
      %s253 = scalar_select %p252, %s251, 3
      %s254 = smul.addr %s253, 2
      %s255 = scalar_lea.vmem %s0, %s254
      %p256 = pneg %p40
      %p257 = pneg %p37
      %p258 = pneg %p61
      %p259 = pneg %p58
      %p260 = pneg %p82
      %p261 = pneg %p79
      %p262 = pneg %p103
      %p263 = pneg %p100
      %p264 = pneg %p129
      %p265 = pneg %p126
      %s266 = smul.u32 2, %s19
      %p267 = scmp.lt.s32.totalorder %s266, 3
      %s268 = scalar_select %p267, %s266, 3
      %s269 = smul.addr %s268, 8
      %s270 = scalar_lea.vmem %s4, %s269
      %p271 = pneg %p155
      %p272 = pneg %p152
      %s273 = smul.u32 2, %s19
      %p274 = scmp.lt.s32.totalorder %s273, 3
      %s275 = scalar_select %p274, %s273, 3
      %s276 = smul.addr %s275, 8
      %s277 = scalar_lea.vmem %s5, %s276
      %p278 = pneg %p181
      %p279 = pneg %p178
      %s280 = smul.u32 2, %s19
      %p281 = scmp.lt.s32.totalorder %s280, 3
      %s282 = scalar_select %p281, %s280, 3
      %s283 = smul.addr %s282, 8
      %s284 = scalar_lea.vmem %s6, %s283
      %p285 = pneg %p207
      %p286 = pneg %p204
      %p287 = scmp.lt.s32.totalorder %s19, 1
      %s288 = scalar_select %p287, %s19, 1
      %s289 = smul.addr %s288, 2
      %s290 = smul.addr %s289, 8
      %s291 = scalar_lea.vmem %s7, %s290
      %s292 = smul.u32 2, %s19
      %p293 = scmp.lt.s32.totalorder %s292, 3
      %s294 = scalar_select %p293, %s292, 3
      %s295 = smul.addr %s294, 2
      %s296 = scalar_lea.vmem %s0, %s295
      %s297 = smul.u32 2, %s19
      %s298 = smul.u32 2, %s19
      %p299 = scmp.lt.s32.totalorder %s298, 3
      %s300 = scalar_select %p299, %s298, 3
      %s301 = smul.addr %s300, 8
      %s302 = scalar_lea.vmem %s4, %s301
      %s303 = smul.u32 2, %s19
      %s304 = smul.u32 2, %s19
      %p305 = scmp.lt.s32.totalorder %s304, 3
      %s306 = scalar_select %p305, %s304, 3
      %s307 = smul.addr %s306, 8
      %s308 = scalar_lea.vmem %s5, %s307
      %s309 = smul.u32 2, %s19
      %s310 = smul.u32 2, %s19
      %p311 = scmp.lt.s32.totalorder %s310, 3
      %s312 = scalar_select %p311, %s310, 3
      %s313 = smul.addr %s312, 8
      %s314 = scalar_lea.vmem %s6, %s313
      %s315 = smul.u32 2, %s19
      %p316 = scmp.lt.s32.totalorder %s19, 1
      %s317 = scalar_select %p316, %s19, 1
      %s318 = smul.addr %s317, 2
      %s319 = smul.addr %s318, 8
      %s320 = scalar_lea.vmem %s7, %s319
      %v321 = vld [vmem:[%s296] ss:$2 sm:$0x3]
      %s322 = scalar_lea.vmem %s296, 1
      %v323 = vld [vmem:[%s322] ss:$2 sm:$0x3]
      %v324 = vld [vmem:[%s2] sm:$0xff]
      %326 = vset.pattern.permute.xlu0 0
      %327 = vperm.xlu0 %326, %v324
      %v328 = vpop.permute.xlu0 %327
      %v331 = vlaneseq
      %v332 = vshrl.u32 %v331, 7
      %v333 = vsub.s32 0, %v332
      %v334 = vrot.slane %v321, %v333
      %v335 = vlaneseq
      %v336 = vshrl.u32 %v335, 7
      %v337 = vsub.s32 1, %v336
      %v338 = vrot.slane %v321, %v337
      %v341 = vmul.f32 %v328, %v334
      %v342 = vmul.f32 %v328, %v338
      %s343 = scalar_lea.vmem %s2, 8
      %v344 = vld [vmem:[%s343] sm:$0xff]
      %346 = vset.pattern.permute.xlu0 0
      %347 = vperm.xlu0 %346, %v344
      %v348 = vpop.permute.xlu0 %347
      %v350 = vadd.f32 %v341, %v348
      %v351 = vadd.f32 %v342, %v348
      %v352 = vmax.f32 %v350, 0.0
      %v353 = vmax.f32 %v351, 0.0
      %v355 = vlaneseq
      %v356 = vshrl.u32 %v355, 7
      %v357 = vsub.s32 0, %v356
      %v358 = vrot.slane %v323, %v357
      %v359 = vlaneseq
      %v360 = vshrl.u32 %v359, 7
      %v361 = vsub.s32 1, %v360
      %v362 = vrot.slane %v323, %v361
      %v365 = vmul.f32 %v328, %v358
      %v366 = vmul.f32 %v328, %v362
      %v367 = vadd.f32 %v365, %v348
      %v368 = vadd.f32 %v366, %v348
      %v369 = vmax.f32 %v367, 0.0
      %v370 = vmax.f32 %v368, 0.0
      %v371 = vadd.f32 %v352, %v369
      %v372 = vadd.f32 %v353, %v370
      %v373 = vld [vmem:[%s1] sm:$0xff]
      %s374 = scalar_lea.vmem %s2, 16
      %v375 = vld [vmem:[%s374] sm:$0xff]
      %377 = vset.pattern.permute.xlu0 0
      %378 = vperm.xlu0 %377, %v375
      %v379 = vpop.permute.xlu0 %378
      %vm381 = vcmask 64512
      %v383 = vsel %vm381, %v373, 0
      %385 = vmatprep.subr.mxu0 %v372
      %386 = vmatpush1.msra.mxu0 %v371
      %387 = vmatprep.subr.mxu0 0.0
      %388 = vmatpush1.msra.mxu0 0.0
      %389 = vmatprep.subr.mxu0 0.0
      %390 = vmatpush1.msra.mxu0 0.0
      %391 = vmatprep.subr.mxu0 0.0
      %392 = vmatpush1.msra.mxu0 0.0
      %393 = vmatprep.subr.mxu0 0.0
      %394 = vmatpush1.msra.mxu0 0.0
      %395 = vmatprep.subr.mxu0 0.0
      %396 = vmatpush1.msra.mxu0 0.0
      %397 = vmatprep.subr.mxu0 0.0
      %398 = vmatpush1.msra.mxu0 0.0
      %399 = vmatprep.subr.mxu0 0.0
      %400 = vmatpush1.msra.mxu0 0.0
      %401 = vmatprep.subr.mxu0 0.0
      %402 = vmatpush1.msra.mxu0 0.0
      %403 = vmatprep.subr.mxu0 0.0
      %404 = vmatpush1.msra.mxu0 0.0
      %405 = vmatprep.subr.mxu0 0.0
      %406 = vmatpush1.msra.mxu0 0.0
      %407 = vmatprep.subr.mxu0 0.0
      %408 = vmatpush1.msra.mxu0 0.0
      %409 = vmatprep.subr.mxu0 0.0
      %410 = vmatpush1.msra.mxu0 0.0
      %411 = vmatprep.subr.mxu0 0.0
      %412 = vmatpush1.msra.mxu0 0.0
      %413 = vmatprep.subr.mxu0 0.0
      %414 = vmatpush1.msra.mxu0 0.0
      %415 = vmatprep.subr.mxu0 0.0
      %416 = vmatpush1.msra.mxu0 0.0
      %417 = vmatprep.subr.mxu0 0.0
      %418 = vmatpush1.msra.mxu0 0.0
      %419 = vmatprep.subr.mxu0 0.0
      %420 = vmatpush1.msra.mxu0 0.0
      %421 = vmatprep.subr.mxu0 0.0
      %422 = vmatpush1.msra.mxu0 0.0
      %423 = vmatprep.subr.mxu0 0.0
      %424 = vmatpush1.msra.mxu0 0.0
      %425 = vmatprep.subr.mxu0 0.0
      %426 = vmatpush1.msra.mxu0 0.0
      %427 = vmatprep.subr.mxu0 0.0
      %428 = vmatpush1.msra.mxu0 0.0
      %429 = vmatprep.subr.mxu0 0.0
      %430 = vmatpush1.msra.mxu0 0.0
      %431 = vmatprep.subr.mxu0 0.0
      %432 = vmatpush1.msra.mxu0 0.0
      %433 = vmatprep.subr.mxu0 0.0
      %434 = vmatpush1.msra.mxu0 0.0
      %435 = vmatprep.subr.mxu0 0.0
      %436 = vmatpush1.msra.mxu0 0.0
      %437 = vmatprep.subr.mxu0 0.0
      %438 = vmatpush1.msra.mxu0 0.0
      %439 = vmatprep.subr.mxu0 0.0
      %440 = vmatpush1.msra.mxu0 0.0
      %441 = vmatprep.subr.mxu0 0.0
      %442 = vmatpush1.msra.mxu0 0.0
      %443 = vmatprep.subr.mxu0 0.0
      %444 = vmatpush1.msra.mxu0 0.0
      %445 = vmatprep.subr.mxu0 0.0
      %446 = vmatpush1.msra.mxu0 0.0
      %447 = vmatprep.subr.mxu0 0.0
      %448 = vmatpush1.msra.mxu0 0.0
      %449 = vmatprep.mubr.f32.mxu0 0.0
      %450 = vmatmul.mubr.f32.gmra.mrb[0].mxu0 %v383
      %v451 = vpop.f32.mrb[0].mxu0
      %v452 = vadd.f32 %v379, %v451
      %v453 = vpop.f32.mrb[0].mxu0
      %v454 = vadd.f32 %v379, %v453
      %455 = vdwg.mxu0
      %v456 = vmax.f32 %v452, 0.0
      %v457 = vmax.f32 %v454, 0.0
      %v458 = vmul.f32 %v456, 2.0
      %v459 = vmul.f32 %v457, 2.0
      %s460 = scalar_lea.vmem %s1, 8
      %v461 = vld [vmem:[%s460] sm:$0xff]
      %s462 = scalar_lea.vmem %s2, 24
      %v463 = vld [vmem:[%s462] sm:$0xff]
      %465 = vset.pattern.permute.xlu0 0
      %466 = vperm.xlu0 %465, %v463
      %v467 = vpop.permute.xlu0 %466
      %v470 = vsel %vm381, %v461, 0
      %472 = vmatprep.subr.mxu0 %v459
      %473 = vmatpush1.msra.mxu0 %v458
      %474 = vmatprep.subr.mxu0 0.0
      %475 = vmatpush1.msra.mxu0 0.0
      %476 = vmatprep.subr.mxu0 0.0
      %477 = vmatpush1.msra.mxu0 0.0
      %478 = vmatprep.subr.mxu0 0.0
      %479 = vmatpush1.msra.mxu0 0.0
      %480 = vmatprep.subr.mxu0 0.0
      %481 = vmatpush1.msra.mxu0 0.0
      %482 = vmatprep.subr.mxu0 0.0
      %483 = vmatpush1.msra.mxu0 0.0
      %484 = vmatprep.subr.mxu0 0.0
      %485 = vmatpush1.msra.mxu0 0.0
      %486 = vmatprep.subr.mxu0 0.0
      %487 = vmatpush1.msra.mxu0 0.0
      %488 = vmatprep.subr.mxu0 0.0
      %489 = vmatpush1.msra.mxu0 0.0
      %490 = vmatprep.subr.mxu0 0.0
      %491 = vmatpush1.msra.mxu0 0.0
      %492 = vmatprep.subr.mxu0 0.0
      %493 = vmatpush1.msra.mxu0 0.0
      %494 = vmatprep.subr.mxu0 0.0
      %495 = vmatpush1.msra.mxu0 0.0
      %496 = vmatprep.subr.mxu0 0.0
      %497 = vmatpush1.msra.mxu0 0.0
      %498 = vmatprep.subr.mxu0 0.0
      %499 = vmatpush1.msra.mxu0 0.0
      %500 = vmatprep.subr.mxu0 0.0
      %501 = vmatpush1.msra.mxu0 0.0
      %502 = vmatprep.subr.mxu0 0.0
      %503 = vmatpush1.msra.mxu0 0.0
      %504 = vmatprep.subr.mxu0 0.0
      %505 = vmatpush1.msra.mxu0 0.0
      %506 = vmatprep.subr.mxu0 0.0
      %507 = vmatpush1.msra.mxu0 0.0
      %508 = vmatprep.subr.mxu0 0.0
      %509 = vmatpush1.msra.mxu0 0.0
      %510 = vmatprep.subr.mxu0 0.0
      %511 = vmatpush1.msra.mxu0 0.0
      %512 = vmatprep.subr.mxu0 0.0
      %513 = vmatpush1.msra.mxu0 0.0
      %514 = vmatprep.subr.mxu0 0.0
      %515 = vmatpush1.msra.mxu0 0.0
      %516 = vmatprep.subr.mxu0 0.0
      %517 = vmatpush1.msra.mxu0 0.0
      %518 = vmatprep.subr.mxu0 0.0
      %519 = vmatpush1.msra.mxu0 0.0
      %520 = vmatprep.subr.mxu0 0.0
      %521 = vmatpush1.msra.mxu0 0.0
      %522 = vmatprep.subr.mxu0 0.0
      %523 = vmatpush1.msra.mxu0 0.0
      %524 = vmatprep.subr.mxu0 0.0
      %525 = vmatpush1.msra.mxu0 0.0
      %526 = vmatprep.subr.mxu0 0.0
      %527 = vmatpush1.msra.mxu0 0.0
      %528 = vmatprep.subr.mxu0 0.0
      %529 = vmatpush1.msra.mxu0 0.0
      %530 = vmatprep.subr.mxu0 0.0
      %531 = vmatpush1.msra.mxu0 0.0
      %532 = vmatprep.subr.mxu0 0.0
      %533 = vmatpush1.msra.mxu0 0.0
      %534 = vmatprep.subr.mxu0 0.0
      %535 = vmatpush1.msra.mxu0 0.0
      %536 = vmatprep.mubr.f32.mxu0 0.0
      %537 = vmatmul.mubr.f32.gmra.mrb[0].mxu0 %v470
      %v538 = vpop.f32.mrb[0].mxu0
      %v539 = vadd.f32 %v467, %v538
      %v540 = vpop.f32.mrb[0].mxu0
      %v541 = vadd.f32 %v467, %v540
      %542 = vdwg.mxu0
      %v543 = vmax.f32 %v539, 0.0
      %v544 = vmax.f32 %v541, 0.0
      %v545 = vmul.f32 %v543, 2.0
      %v546 = vmul.f32 %v544, 2.0
      %s547 = scalar_lea.vmem %s1, 16
      %v548 = vld [vmem:[%s547] sm:$0xff]
      %s549 = scalar_lea.vmem %s2, 32
      %v550 = vld [vmem:[%s549] sm:$0xff]
      %552 = vset.pattern.permute.xlu0 0
      %553 = vperm.xlu0 %552, %v550
      %v554 = vpop.permute.xlu0 %553
      %v557 = vsel %vm381, %v548, 0
      %559 = vmatprep.subr.mxu0 %v372
      %560 = vmatpush1.msra.mxu0 %v371
      %561 = vmatprep.subr.mxu0 0.0
      %562 = vmatpush1.msra.mxu0 0.0
      %563 = vmatprep.subr.mxu0 0.0
      %564 = vmatpush1.msra.mxu0 0.0
      %565 = vmatprep.subr.mxu0 0.0
      %566 = vmatpush1.msra.mxu0 0.0
      %567 = vmatprep.subr.mxu0 0.0
      %568 = vmatpush1.msra.mxu0 0.0
      %569 = vmatprep.subr.mxu0 0.0
      %570 = vmatpush1.msra.mxu0 0.0
      %571 = vmatprep.subr.mxu0 0.0
      %572 = vmatpush1.msra.mxu0 0.0
      %573 = vmatprep.subr.mxu0 0.0
      %574 = vmatpush1.msra.mxu0 0.0
      %575 = vmatprep.subr.mxu0 0.0
      %576 = vmatpush1.msra.mxu0 0.0
      %577 = vmatprep.subr.mxu0 0.0
      %578 = vmatpush1.msra.mxu0 0.0
      %579 = vmatprep.subr.mxu0 0.0
      %580 = vmatpush1.msra.mxu0 0.0
      %581 = vmatprep.subr.mxu0 0.0
      %582 = vmatpush1.msra.mxu0 0.0
      %583 = vmatprep.subr.mxu0 0.0
      %584 = vmatpush1.msra.mxu0 0.0
      %585 = vmatprep.subr.mxu0 0.0
      %586 = vmatpush1.msra.mxu0 0.0
      %587 = vmatprep.subr.mxu0 0.0
      %588 = vmatpush1.msra.mxu0 0.0
      %589 = vmatprep.subr.mxu0 0.0
      %590 = vmatpush1.msra.mxu0 0.0
      %591 = vmatprep.subr.mxu0 0.0
      %592 = vmatpush1.msra.mxu0 0.0
      %593 = vmatprep.subr.mxu0 0.0
      %594 = vmatpush1.msra.mxu0 0.0
      %595 = vmatprep.subr.mxu0 0.0
      %596 = vmatpush1.msra.mxu0 0.0
      %597 = vmatprep.subr.mxu0 0.0
      %598 = vmatpush1.msra.mxu0 0.0
      %599 = vmatprep.subr.mxu0 0.0
      %600 = vmatpush1.msra.mxu0 0.0
      %601 = vmatprep.subr.mxu0 0.0
      %602 = vmatpush1.msra.mxu0 0.0
      %603 = vmatprep.subr.mxu0 0.0
      %604 = vmatpush1.msra.mxu0 0.0
      %605 = vmatprep.subr.mxu0 0.0
      %606 = vmatpush1.msra.mxu0 0.0
      %607 = vmatprep.subr.mxu0 0.0
      %608 = vmatpush1.msra.mxu0 0.0
      %609 = vmatprep.subr.mxu0 0.0
      %610 = vmatpush1.msra.mxu0 0.0
      %611 = vmatprep.subr.mxu0 0.0
      %612 = vmatpush1.msra.mxu0 0.0
      %613 = vmatprep.subr.mxu0 0.0
      %614 = vmatpush1.msra.mxu0 0.0
      %615 = vmatprep.subr.mxu0 0.0
      %616 = vmatpush1.msra.mxu0 0.0
      %617 = vmatprep.subr.mxu0 0.0
      %618 = vmatpush1.msra.mxu0 0.0
      %619 = vmatprep.subr.mxu0 0.0
      %620 = vmatpush1.msra.mxu0 0.0
      %621 = vmatprep.subr.mxu0 0.0
      %622 = vmatpush1.msra.mxu0 0.0
      %623 = vmatprep.mubr.f32.mxu0 0.0
      %624 = vmatmul.mubr.f32.gmra.mrb[0].mxu0 %v557
      %v625 = vpop.f32.mrb[0].mxu0
      %v626 = vadd.f32 %v554, %v625
      %v627 = vpop.f32.mrb[0].mxu0
      %v628 = vadd.f32 %v554, %v627
      %629 = vdwg.mxu0
      %v630 = vmax.f32 %v626, 0.0
      %v631 = vmax.f32 %v628, 0.0
      %v632 = vmul.f32 %v630, 2.0
      %v633 = vmul.f32 %v631, 2.0
      %s634 = scalar_lea.vmem %s1, 24
      %v635 = vld [vmem:[%s634] sm:$0xff]
      %s636 = scalar_lea.vmem %s1, 32
      %v637 = vld [vmem:[%s636] sm:$0xff]
      %v639 = vsel %vm381, %v637, 0
      %641 = vmatprep.subr.mxu0 %v633
      %642 = vmatpush1.msra.mxu0 %v632
      %643 = vmatprep.subr.mxu0 0.0
      %644 = vmatpush1.msra.mxu0 0.0
      %645 = vmatprep.subr.mxu0 0.0
      %646 = vmatpush1.msra.mxu0 0.0
      %647 = vmatprep.subr.mxu0 0.0
      %648 = vmatpush1.msra.mxu0 0.0
      %649 = vmatprep.subr.mxu0 0.0
      %650 = vmatpush1.msra.mxu0 0.0
      %651 = vmatprep.subr.mxu0 0.0
      %652 = vmatpush1.msra.mxu0 0.0
      %653 = vmatprep.subr.mxu0 0.0
      %654 = vmatpush1.msra.mxu0 0.0
      %655 = vmatprep.subr.mxu0 0.0
      %656 = vmatpush1.msra.mxu0 0.0
      %657 = vmatprep.subr.mxu0 0.0
      %658 = vmatpush1.msra.mxu0 0.0
      %659 = vmatprep.subr.mxu0 0.0
      %660 = vmatpush1.msra.mxu0 0.0
      %661 = vmatprep.subr.mxu0 0.0
      %662 = vmatpush1.msra.mxu0 0.0
      %663 = vmatprep.subr.mxu0 0.0
      %664 = vmatpush1.msra.mxu0 0.0
      %665 = vmatprep.subr.mxu0 0.0
      %666 = vmatpush1.msra.mxu0 0.0
      %667 = vmatprep.subr.mxu0 0.0
      %668 = vmatpush1.msra.mxu0 0.0
      %669 = vmatprep.subr.mxu0 0.0
      %670 = vmatpush1.msra.mxu0 0.0
      %671 = vmatprep.subr.mxu0 0.0
      %672 = vmatpush1.msra.mxu0 0.0
      %673 = vmatprep.subr.mxu0 0.0
      %674 = vmatpush1.msra.mxu0 0.0
      %675 = vmatprep.subr.mxu0 0.0
      %676 = vmatpush1.msra.mxu0 0.0
      %677 = vmatprep.subr.mxu0 0.0
      %678 = vmatpush1.msra.mxu0 0.0
      %679 = vmatprep.subr.mxu0 0.0
      %680 = vmatpush1.msra.mxu0 0.0
      %681 = vmatprep.subr.mxu0 0.0
      %682 = vmatpush1.msra.mxu0 0.0
      %683 = vmatprep.subr.mxu0 0.0
      %684 = vmatpush1.msra.mxu0 0.0
      %685 = vmatprep.subr.mxu0 0.0
      %686 = vmatpush1.msra.mxu0 0.0
      %687 = vmatprep.subr.mxu0 0.0
      %688 = vmatpush1.msra.mxu0 0.0
      %689 = vmatprep.subr.mxu0 0.0
      %690 = vmatpush1.msra.mxu0 0.0
      %691 = vmatprep.subr.mxu0 0.0
      %692 = vmatpush1.msra.mxu0 0.0
      %693 = vmatprep.subr.mxu0 0.0
      %694 = vmatpush1.msra.mxu0 0.0
      %695 = vmatprep.subr.mxu0 0.0
      %696 = vmatpush1.msra.mxu0 0.0
      %697 = vmatprep.subr.mxu0 0.0
      %698 = vmatpush1.msra.mxu0 0.0
      %699 = vmatprep.subr.mxu0 0.0
      %700 = vmatpush1.msra.mxu0 0.0
      %701 = vmatprep.subr.mxu0 0.0
      %702 = vmatpush1.msra.mxu0 0.0
      %703 = vmatprep.subr.mxu0 0.0
      %704 = vmatpush1.msra.mxu0 0.0
      %705 = vmatprep.mubr.f32.mxu0 0.0
      %706 = vmatmul.mubr.f32.gmra.mrb[0].mxu0 %v639
      %v707 = vpop.f32.mrb[0].mxu0
      %v708 = vadd.f32 0.0, %v707
      %v709 = vpop.f32.mrb[0].mxu0
      %v710 = vadd.f32 0.0, %v709
      %711 = vdwg.mxu0
      %v713 = vsel %vm381, %v635, 0
      %715 = vmatprep.subr.mxu0 %v546
      %716 = vmatpush1.msra.mxu0 %v545
      %717 = vmatprep.subr.mxu0 0.0
      %718 = vmatpush1.msra.mxu0 0.0
      %719 = vmatprep.subr.mxu0 0.0
      %720 = vmatpush1.msra.mxu0 0.0
      %721 = vmatprep.subr.mxu0 0.0
      %722 = vmatpush1.msra.mxu0 0.0
      %723 = vmatprep.subr.mxu0 0.0
      %724 = vmatpush1.msra.mxu0 0.0
      %725 = vmatprep.subr.mxu0 0.0
      %726 = vmatpush1.msra.mxu0 0.0
      %727 = vmatprep.subr.mxu0 0.0
      %728 = vmatpush1.msra.mxu0 0.0
      %729 = vmatprep.subr.mxu0 0.0
      %730 = vmatpush1.msra.mxu0 0.0
      %731 = vmatprep.subr.mxu0 0.0
      %732 = vmatpush1.msra.mxu0 0.0
      %733 = vmatprep.subr.mxu0 0.0
      %734 = vmatpush1.msra.mxu0 0.0
      %735 = vmatprep.subr.mxu0 0.0
      %736 = vmatpush1.msra.mxu0 0.0
      %737 = vmatprep.subr.mxu0 0.0
      %738 = vmatpush1.msra.mxu0 0.0
      %739 = vmatprep.subr.mxu0 0.0
      %740 = vmatpush1.msra.mxu0 0.0
      %741 = vmatprep.subr.mxu0 0.0
      %742 = vmatpush1.msra.mxu0 0.0
      %743 = vmatprep.subr.mxu0 0.0
      %744 = vmatpush1.msra.mxu0 0.0
      %745 = vmatprep.subr.mxu0 0.0
      %746 = vmatpush1.msra.mxu0 0.0
      %747 = vmatprep.subr.mxu0 0.0
      %748 = vmatpush1.msra.mxu0 0.0
      %749 = vmatprep.subr.mxu0 0.0
      %750 = vmatpush1.msra.mxu0 0.0
      %751 = vmatprep.subr.mxu0 0.0
      %752 = vmatpush1.msra.mxu0 0.0
      %753 = vmatprep.subr.mxu0 0.0
      %754 = vmatpush1.msra.mxu0 0.0
      %755 = vmatprep.subr.mxu0 0.0
      %756 = vmatpush1.msra.mxu0 0.0
      %757 = vmatprep.subr.mxu0 0.0
      %758 = vmatpush1.msra.mxu0 0.0
      %759 = vmatprep.subr.mxu0 0.0
      %760 = vmatpush1.msra.mxu0 0.0
      %761 = vmatprep.subr.mxu0 0.0
      %762 = vmatpush1.msra.mxu0 0.0
      %763 = vmatprep.subr.mxu0 0.0
      %764 = vmatpush1.msra.mxu0 0.0
      %765 = vmatprep.subr.mxu0 0.0
      %766 = vmatpush1.msra.mxu0 0.0
      %767 = vmatprep.subr.mxu0 0.0
      %768 = vmatpush1.msra.mxu0 0.0
      %769 = vmatprep.subr.mxu0 0.0
      %770 = vmatpush1.msra.mxu0 0.0
      %771 = vmatprep.subr.mxu0 0.0
      %772 = vmatpush1.msra.mxu0 0.0
      %773 = vmatprep.subr.mxu0 0.0
      %774 = vmatpush1.msra.mxu0 0.0
      %775 = vmatprep.subr.mxu0 0.0
      %776 = vmatpush1.msra.mxu0 0.0
      %777 = vmatprep.subr.mxu0 0.0
      %778 = vmatpush1.msra.mxu0 0.0
      %779 = vmatprep.mubr.f32.mxu0 0.0
      %780 = vmatmul.mubr.f32.gmra.mrb[0].mxu0 %v713
      %v781 = vpop.f32.mrb[0].mxu0
      %v782 = vadd.f32 %v708, %v781
      %v783 = vpop.f32.mrb[0].mxu0
      %v784 = vadd.f32 %v710, %v783
      %785 = vdwg.mxu0
      %s786 = scalar_lea.vmem %s2, 40
      %v787 = vld [vmem:[%s786] sm:$0xff]
      %789 = vset.pattern.permute.xlu0 0
      %790 = vperm.xlu0 %789, %v787
      %v791 = vpop.permute.xlu0 %790
      %v793 = vadd.f32 %v782, %v791
      %v794 = vadd.f32 %v784, %v791
      %v795 = vmax.f32 %v793, 0.0
      %v796 = vmax.f32 %v794, 0.0
      %v797 = vmul.f32 %v795, 2.0
      %v798 = vmul.f32 %v796, 2.0
      %s799 = scalar_lea.vmem %s1, 40
      %v800 = vld [vmem:[%s799] sm:$0xff]
      %s801 = scalar_lea.vmem %s2, 48
      %v802 = vld [vmem:[%s801] sm:$0xff]
      %804 = vset.pattern.permute.xlu0 0
      %805 = vperm.xlu0 %804, %v802
      %v806 = vpop.permute.xlu0 %805
      %v809 = vsel %vm381, %v800, 0
      %811 = vmatprep.subr.mxu0 %v459
      %812 = vmatpush1.msra.mxu0 %v458
      %813 = vmatprep.subr.mxu0 0.0
      %814 = vmatpush1.msra.mxu0 0.0
      %815 = vmatprep.subr.mxu0 0.0
      %816 = vmatpush1.msra.mxu0 0.0
      %817 = vmatprep.subr.mxu0 0.0
      %818 = vmatpush1.msra.mxu0 0.0
      %819 = vmatprep.subr.mxu0 0.0
      %820 = vmatpush1.msra.mxu0 0.0
      %821 = vmatprep.subr.mxu0 0.0
      %822 = vmatpush1.msra.mxu0 0.0
      %823 = vmatprep.subr.mxu0 0.0
      %824 = vmatpush1.msra.mxu0 0.0
      %825 = vmatprep.subr.mxu0 0.0
      %826 = vmatpush1.msra.mxu0 0.0
      %827 = vmatprep.subr.mxu0 0.0
      %828 = vmatpush1.msra.mxu0 0.0
      %829 = vmatprep.subr.mxu0 0.0
      %830 = vmatpush1.msra.mxu0 0.0
      %831 = vmatprep.subr.mxu0 0.0
      %832 = vmatpush1.msra.mxu0 0.0
      %833 = vmatprep.subr.mxu0 0.0
      %834 = vmatpush1.msra.mxu0 0.0
      %835 = vmatprep.subr.mxu0 0.0
      %836 = vmatpush1.msra.mxu0 0.0
      %837 = vmatprep.subr.mxu0 0.0
      %838 = vmatpush1.msra.mxu0 0.0
      %839 = vmatprep.subr.mxu0 0.0
      %840 = vmatpush1.msra.mxu0 0.0
      %841 = vmatprep.subr.mxu0 0.0
      %842 = vmatpush1.msra.mxu0 0.0
      %843 = vmatprep.subr.mxu0 0.0
      %844 = vmatpush1.msra.mxu0 0.0
      %845 = vmatprep.subr.mxu0 0.0
      %846 = vmatpush1.msra.mxu0 0.0
      %847 = vmatprep.subr.mxu0 0.0
      %848 = vmatpush1.msra.mxu0 0.0
      %849 = vmatprep.subr.mxu0 0.0
      %850 = vmatpush1.msra.mxu0 0.0
      %851 = vmatprep.subr.mxu0 0.0
      %852 = vmatpush1.msra.mxu0 0.0
      %853 = vmatprep.subr.mxu0 0.0
      %854 = vmatpush1.msra.mxu0 0.0
      %855 = vmatprep.subr.mxu0 0.0
      %856 = vmatpush1.msra.mxu0 0.0
      %857 = vmatprep.subr.mxu0 0.0
      %858 = vmatpush1.msra.mxu0 0.0
      %859 = vmatprep.subr.mxu0 0.0
      %860 = vmatpush1.msra.mxu0 0.0
      %861 = vmatprep.subr.mxu0 0.0
      %862 = vmatpush1.msra.mxu0 0.0
      %863 = vmatprep.subr.mxu0 0.0
      %864 = vmatpush1.msra.mxu0 0.0
      %865 = vmatprep.subr.mxu0 0.0
      %866 = vmatpush1.msra.mxu0 0.0
      %867 = vmatprep.subr.mxu0 0.0
      %868 = vmatpush1.msra.mxu0 0.0
      %869 = vmatprep.subr.mxu0 0.0
      %870 = vmatpush1.msra.mxu0 0.0
      %871 = vmatprep.subr.mxu0 0.0
      %872 = vmatpush1.msra.mxu0 0.0
      %873 = vmatprep.subr.mxu0 0.0
      %874 = vmatpush1.msra.mxu0 0.0
      %875 = vmatprep.mubr.f32.mxu0 0.0
      %876 = vmatmul.mubr.f32.gmra.mrb[0].mxu0 %v809
      %v877 = vpop.f32.mrb[0].mxu0
      %v878 = vadd.f32 %v806, %v877
      %v879 = vpop.f32.mrb[0].mxu0
      %v880 = vadd.f32 %v806, %v879
      %881 = vdwg.mxu0
      %v882 = vmax.f32 %v878, 0.0
      %v883 = vmax.f32 %v880, 0.0
      %v884 = vmul.f32 %v882, 2.0
      %v885 = vmul.f32 %v883, 2.0
      %s886 = scalar_lea.vmem %s1, 48
      %v887 = vld [vmem:[%s886] sm:$0xff]
      %s888 = scalar_lea.vmem %s1, 56
      %v889 = vld [vmem:[%s888] sm:$0xff]
      %v891 = vsel %vm381, %v889, 0
      %893 = vmatprep.subr.mxu0 %v885
      %894 = vmatpush1.msra.mxu0 %v884
      %895 = vmatprep.subr.mxu0 0.0
      %896 = vmatpush1.msra.mxu0 0.0
      %897 = vmatprep.subr.mxu0 0.0
      %898 = vmatpush1.msra.mxu0 0.0
      %899 = vmatprep.subr.mxu0 0.0
      %900 = vmatpush1.msra.mxu0 0.0
      %901 = vmatprep.subr.mxu0 0.0
      %902 = vmatpush1.msra.mxu0 0.0
      %903 = vmatprep.subr.mxu0 0.0
      %904 = vmatpush1.msra.mxu0 0.0
      %905 = vmatprep.subr.mxu0 0.0
      %906 = vmatpush1.msra.mxu0 0.0
      %907 = vmatprep.subr.mxu0 0.0
      %908 = vmatpush1.msra.mxu0 0.0
      %909 = vmatprep.subr.mxu0 0.0
      %910 = vmatpush1.msra.mxu0 0.0
      %911 = vmatprep.subr.mxu0 0.0
      %912 = vmatpush1.msra.mxu0 0.0
      %913 = vmatprep.subr.mxu0 0.0
      %914 = vmatpush1.msra.mxu0 0.0
      %915 = vmatprep.subr.mxu0 0.0
      %916 = vmatpush1.msra.mxu0 0.0
      %917 = vmatprep.subr.mxu0 0.0
      %918 = vmatpush1.msra.mxu0 0.0
      %919 = vmatprep.subr.mxu0 0.0
      %920 = vmatpush1.msra.mxu0 0.0
      %921 = vmatprep.subr.mxu0 0.0
      %922 = vmatpush1.msra.mxu0 0.0
      %923 = vmatprep.subr.mxu0 0.0
      %924 = vmatpush1.msra.mxu0 0.0
      %925 = vmatprep.subr.mxu0 0.0
      %926 = vmatpush1.msra.mxu0 0.0
      %927 = vmatprep.subr.mxu0 0.0
      %928 = vmatpush1.msra.mxu0 0.0
      %929 = vmatprep.subr.mxu0 0.0
      %930 = vmatpush1.msra.mxu0 0.0
      %931 = vmatprep.subr.mxu0 0.0
      %932 = vmatpush1.msra.mxu0 0.0
      %933 = vmatprep.subr.mxu0 0.0
      %934 = vmatpush1.msra.mxu0 0.0
      %935 = vmatprep.subr.mxu0 0.0
      %936 = vmatpush1.msra.mxu0 0.0
      %937 = vmatprep.subr.mxu0 0.0
      %938 = vmatpush1.msra.mxu0 0.0
      %939 = vmatprep.subr.mxu0 0.0
      %940 = vmatpush1.msra.mxu0 0.0
      %941 = vmatprep.subr.mxu0 0.0
      %942 = vmatpush1.msra.mxu0 0.0
      %943 = vmatprep.subr.mxu0 0.0
      %944 = vmatpush1.msra.mxu0 0.0
      %945 = vmatprep.subr.mxu0 0.0
      %946 = vmatpush1.msra.mxu0 0.0
      %947 = vmatprep.subr.mxu0 0.0
      %948 = vmatpush1.msra.mxu0 0.0
      %949 = vmatprep.subr.mxu0 0.0
      %950 = vmatpush1.msra.mxu0 0.0
      %951 = vmatprep.subr.mxu0 0.0
      %952 = vmatpush1.msra.mxu0 0.0
      %953 = vmatprep.subr.mxu0 0.0
      %954 = vmatpush1.msra.mxu0 0.0
      %955 = vmatprep.subr.mxu0 0.0
      %956 = vmatpush1.msra.mxu0 0.0
      %957 = vmatprep.mubr.f32.mxu0 0.0
      %958 = vmatmul.mubr.f32.gmra.mrb[0].mxu0 %v891
      %v959 = vpop.f32.mrb[0].mxu0
      %v960 = vadd.f32 0.0, %v959
      %v961 = vpop.f32.mrb[0].mxu0
      %v962 = vadd.f32 0.0, %v961
      %963 = vdwg.mxu0
      %v965 = vsel %vm381, %v887, 0
      %967 = vmatprep.subr.mxu0 %v798
      %968 = vmatpush1.msra.mxu0 %v797
      %969 = vmatprep.subr.mxu0 0.0
      %970 = vmatpush1.msra.mxu0 0.0
      %971 = vmatprep.subr.mxu0 0.0
      %972 = vmatpush1.msra.mxu0 0.0
      %973 = vmatprep.subr.mxu0 0.0
      %974 = vmatpush1.msra.mxu0 0.0
      %975 = vmatprep.subr.mxu0 0.0
      %976 = vmatpush1.msra.mxu0 0.0
      %977 = vmatprep.subr.mxu0 0.0
      %978 = vmatpush1.msra.mxu0 0.0
      %979 = vmatprep.subr.mxu0 0.0
      %980 = vmatpush1.msra.mxu0 0.0
      %981 = vmatprep.subr.mxu0 0.0
      %982 = vmatpush1.msra.mxu0 0.0
      %983 = vmatprep.subr.mxu0 0.0
      %984 = vmatpush1.msra.mxu0 0.0
      %985 = vmatprep.subr.mxu0 0.0
      %986 = vmatpush1.msra.mxu0 0.0
      %987 = vmatprep.subr.mxu0 0.0
      %988 = vmatpush1.msra.mxu0 0.0
      %989 = vmatprep.subr.mxu0 0.0
      %990 = vmatpush1.msra.mxu0 0.0
      %991 = vmatprep.subr.mxu0 0.0
      %992 = vmatpush1.msra.mxu0 0.0
      %993 = vmatprep.subr.mxu0 0.0
      %994 = vmatpush1.msra.mxu0 0.0
      %995 = vmatprep.subr.mxu0 0.0
      %996 = vmatpush1.msra.mxu0 0.0
      %997 = vmatprep.subr.mxu0 0.0
      %998 = vmatpush1.msra.mxu0 0.0
      %999 = vmatprep.subr.mxu0 0.0
      %1000 = vmatpush1.msra.mxu0 0.0
      %1001 = vmatprep.subr.mxu0 0.0
      %1002 = vmatpush1.msra.mxu0 0.0
      %1003 = vmatprep.subr.mxu0 0.0
      %1004 = vmatpush1.msra.mxu0 0.0
      %1005 = vmatprep.subr.mxu0 0.0
      %1006 = vmatpush1.msra.mxu0 0.0
      %1007 = vmatprep.subr.mxu0 0.0
      %1008 = vmatpush1.msra.mxu0 0.0
      %1009 = vmatprep.subr.mxu0 0.0
      %1010 = vmatpush1.msra.mxu0 0.0
      %1011 = vmatprep.subr.mxu0 0.0
      %1012 = vmatpush1.msra.mxu0 0.0
      %1013 = vmatprep.subr.mxu0 0.0
      %1014 = vmatpush1.msra.mxu0 0.0
      %1015 = vmatprep.subr.mxu0 0.0
      %1016 = vmatpush1.msra.mxu0 0.0
      %1017 = vmatprep.subr.mxu0 0.0
      %1018 = vmatpush1.msra.mxu0 0.0
      %1019 = vmatprep.subr.mxu0 0.0
      %1020 = vmatpush1.msra.mxu0 0.0
      %1021 = vmatprep.subr.mxu0 0.0
      %1022 = vmatpush1.msra.mxu0 0.0
      %1023 = vmatprep.subr.mxu0 0.0
      %1024 = vmatpush1.msra.mxu0 0.0
      %1025 = vmatprep.subr.mxu0 0.0
      %1026 = vmatpush1.msra.mxu0 0.0
      %1027 = vmatprep.subr.mxu0 0.0
      %1028 = vmatpush1.msra.mxu0 0.0
      %1029 = vmatprep.subr.mxu0 0.0
      %1030 = vmatpush1.msra.mxu0 0.0
      %1031 = vmatprep.mubr.f32.mxu0 0.0
      %1032 = vmatmul.mubr.f32.gmra.mrb[0].mxu0 %v965
      %v1033 = vpop.f32.mrb[0].mxu0
      %v1034 = vadd.f32 %v960, %v1033
      %v1035 = vpop.f32.mrb[0].mxu0
      %v1036 = vadd.f32 %v962, %v1035
      %1037 = vdwg.mxu0
      %s1038 = scalar_lea.vmem %s2, 56
      %v1039 = vld [vmem:[%s1038] sm:$0xff]
      %1041 = vset.pattern.permute.xlu0 0
      %1042 = vperm.xlu0 %1041, %v1039
      %v1043 = vpop.permute.xlu0 %1042
      %v1045 = vadd.f32 %v1034, %v1043
      %v1046 = vadd.f32 %v1036, %v1043
      %v1047 = vmax.f32 %v1045, 0.0
      %v1048 = vmax.f32 %v1046, 0.0
      %1049 = vst [vmem:[%s302] sm:$0xff] %v371
      %1050 = vst [vmem:[%s302 + $0x8] sm:$0xff] %v372
      %1051 = vst [vmem:[%s308] sm:$0xff] %v458
      %1052 = vst [vmem:[%s308 + $0x8] sm:$0xff] %v459
      %1053 = vst [vmem:[%s314] sm:$0xff] %v545
      %1054 = vst [vmem:[%s314 + $0x8] sm:$0xff] %v546
      %v1055 = vld [vmem:[%s3] sm:$0xff]
      %v1056 = vld [vmem:[%s3 + $0x8] sm:$0xff]
      %v1057 = vld [vmem:[%s3 + $0x10] sm:$0xff]
      %v1058 = vld [vmem:[%s3 + $0x18] sm:$0xff]
      %v1059 = vld [vmem:[%s3 + $0x20] sm:$0xff]
      %v1060 = vld [vmem:[%s3 + $0x28] sm:$0xff]
      %v1061 = vld [vmem:[%s3 + $0x30] sm:$0xff]
      %v1062 = vld [vmem:[%s3 + $0x38] sm:$0xff]
      %v1063 = vld [vmem:[%s3 + $0x40] sm:$0xff]
      %v1064 = vld [vmem:[%s3 + $0x48] sm:$0xff]
      %v1065 = vld [vmem:[%s3 + $0x50] sm:$0xff]
      %v1066 = vld [vmem:[%s3 + $0x58] sm:$0xff]
      %v1067 = vld [vmem:[%s3 + $0x60] sm:$0xff]
      %v1068 = vld [vmem:[%s3 + $0x68] sm:$0xff]
      %v1069 = vld [vmem:[%s3 + $0x70] sm:$0xff]
      %v1070 = vld [vmem:[%s3 + $0x78] sm:$0xff]
      %v1071 = vld [vmem:[%s3 + $0x80] sm:$0xff]
      %v1072 = vld [vmem:[%s3 + $0x88] sm:$0xff]
      %v1073 = vld [vmem:[%s3 + $0x90] sm:$0xff]
      %v1074 = vld [vmem:[%s3 + $0x98] sm:$0xff]
      %v1075 = vld [vmem:[%s3 + $0xa0] sm:$0xff]
      %v1076 = vld [vmem:[%s3 + $0xa8] sm:$0xff]
      %v1077 = vld [vmem:[%s3 + $0xb0] sm:$0xff]
      %v1078 = vld [vmem:[%s3 + $0xb8] sm:$0xff]
      %v1079 = vld [vmem:[%s3 + $0xc0] sm:$0xff]
      %v1080 = vld [vmem:[%s3 + $0xc8] sm:$0xff]
      %v1081 = vld [vmem:[%s3 + $0xd0] sm:$0xff]
      %v1082 = vld [vmem:[%s3 + $0xd8] sm:$0xff]
      %v1083 = vld [vmem:[%s3 + $0xe0] sm:$0xff]
      %v1084 = vld [vmem:[%s3 + $0xe8] sm:$0xff]
      %v1085 = vld [vmem:[%s3 + $0xf0] sm:$0xff]
      %v1086 = vld [vmem:[%s3 + $0xf8] sm:$0xff]
      %s1087 = scalar_lea.vmem %s2, 64
      %v1088 = vld [vmem:[%s1087] sm:$0xff]
      %1090 = vset.pattern.permute.xlu0 0
      %1091 = vperm.xlu0 %1090, %v1088
      %v1092 = vpop.permute.xlu0 %1091
      %1094 = vmatprep.subr.mxu0 0.0
      %1095 = vmatpush1.msra.mxu0 %v1055
      %1096 = vmatprep.subr.mxu0 0.0
      %1097 = vmatpush1.msra.mxu0 %v1056
      %1098 = vmatprep.subr.mxu0 0.0
      %1099 = vmatpush1.msra.mxu0 %v1057
      %1100 = vmatprep.subr.mxu0 0.0
      %1101 = vmatpush1.msra.mxu0 %v1058
      %1102 = vmatprep.subr.mxu0 0.0
      %1103 = vmatpush1.msra.mxu0 %v1059
      %1104 = vmatprep.subr.mxu0 0.0
      %1105 = vmatpush1.msra.mxu0 %v1060
      %1106 = vmatprep.subr.mxu0 0.0
      %1107 = vmatpush1.msra.mxu0 %v1061
      %1108 = vmatprep.subr.mxu0 0.0
      %1109 = vmatpush1.msra.mxu0 %v1062
      %1110 = vmatprep.subr.mxu0 0.0
      %1111 = vmatpush1.msra.mxu0 %v1063
      %1112 = vmatprep.subr.mxu0 0.0
      %1113 = vmatpush1.msra.mxu0 %v1064
      %1114 = vmatprep.subr.mxu0 0.0
      %1115 = vmatpush1.msra.mxu0 %v1065
      %1116 = vmatprep.subr.mxu0 0.0
      %1117 = vmatpush1.msra.mxu0 %v1066
      %1118 = vmatprep.subr.mxu0 0.0
      %1119 = vmatpush1.msra.mxu0 %v1067
      %1120 = vmatprep.subr.mxu0 0.0
      %1121 = vmatpush1.msra.mxu0 %v1068
      %1122 = vmatprep.subr.mxu0 0.0
      %1123 = vmatpush1.msra.mxu0 %v1069
      %1124 = vmatprep.subr.mxu0 0.0
      %1125 = vmatpush1.msra.mxu0 %v1070
      %1126 = vmatprep.subr.mxu0 0.0
      %1127 = vmatpush1.msra.mxu0 %v1071
      %1128 = vmatprep.subr.mxu0 0.0
      %1129 = vmatpush1.msra.mxu0 %v1072
      %1130 = vmatprep.subr.mxu0 0.0
      %1131 = vmatpush1.msra.mxu0 %v1073
      %1132 = vmatprep.subr.mxu0 0.0
      %1133 = vmatpush1.msra.mxu0 %v1074
      %1134 = vmatprep.subr.mxu0 0.0
      %1135 = vmatpush1.msra.mxu0 %v1075
      %1136 = vmatprep.subr.mxu0 0.0
      %1137 = vmatpush1.msra.mxu0 %v1076
      %1138 = vmatprep.subr.mxu0 0.0
      %1139 = vmatpush1.msra.mxu0 %v1077
      %1140 = vmatprep.subr.mxu0 0.0
      %1141 = vmatpush1.msra.mxu0 %v1078
      %1142 = vmatprep.subr.mxu0 0.0
      %1143 = vmatpush1.msra.mxu0 %v1079
      %1144 = vmatprep.subr.mxu0 0.0
      %1145 = vmatpush1.msra.mxu0 %v1080
      %1146 = vmatprep.subr.mxu0 0.0
      %1147 = vmatpush1.msra.mxu0 %v1081
      %1148 = vmatprep.subr.mxu0 0.0
      %1149 = vmatpush1.msra.mxu0 %v1082
      %1150 = vmatprep.subr.mxu0 0.0
      %1151 = vmatpush1.msra.mxu0 %v1083
      %1152 = vmatprep.subr.mxu0 0.0
      %1153 = vmatpush1.msra.mxu0 %v1084
      %1154 = vmatprep.subr.mxu0 0.0
      %1155 = vmatpush1.msra.mxu0 %v1085
      %1156 = vmatprep.subr.mxu0 0.0
      %1157 = vmatpush1.msra.mxu0 %v1086
      %1158 = vmatprep.mubr.f32.mxu0 %v1048
      %1159 = vmatmul.mubr.f32.gmra.mrb[0].mxu0 %v1047
      %v1160 = vpop.f32.mrb[0].mxu0
      %v1161 = vadd.f32 %v1092, %v1160
      %v1162 = vpop.f32.mrb[0].mxu0
      %1163 = vdwg.mxu0
      %v1164 = vsub.f32 0.0, %v1161
      %v1165 = vmul.f32 %v1164, 1.442695
      %v1166 = vpow.pop %v1165
      %v1167 = vadd.f32 %v1166, 1.0
      %v1168 = vrcp.pop %v1167
      %v1169 = vmul.f32 1.0, %v1168
      %s1170 = scalar_lea.vmem %s320, 8
      %vm1171 = vcmask 261120
      %1172 = vst.msk [vmem:[%s1170] sm:$0xff] %vm1171, %v1169
      %v1173 = vsub.f32 1.0, %v1169
      %1174 = vst.msk [vmem:[%s320] sm:$0xff] %vm1171, %v1173
      %s1175 = smul.u32 2, %s19
      %p1176 = scmp.lt.s32.totalorder %s1175, 3
      %s1177 = scalar_select %p1176, %s1175, 3
      %s1178 = smul.addr %s1177, 8
      %s1179 = scalar_lea.vmem %s4, %s1178
      %s1180 = smul.u32 2, %s19
      %p1181 = scmp.lt.s32.totalorder %s1180, 3
      %s1182 = scalar_select %p1181, %s1180, 3
      %s1183 = smul.addr %s1182, 8
      %s1184 = scalar_lea.vmem %s5, %s1183
      %s1185 = smul.u32 2, %s19
      %p1186 = scmp.lt.s32.totalorder %s1185, 3
      %s1187 = scalar_select %p1186, %s1185, 3
      %s1188 = smul.addr %s1187, 8
      %s1189 = scalar_lea.vmem %s6, %s1188
      %p1190 = scmp.lt.s32.totalorder %s19, 1
      %s1191 = scalar_select %p1190, %s19, 1
      %s1192 = smul.addr %s1191, 2
      %s1193 = smul.addr %s1192, 8
      %s1194 = scalar_lea.vmem %s7, %s1193
      // Predicated region
      $region37: #{network_kde_forward.1} parent=35 // pred_check
        %p1195 = pneg %p126
      $region38: #{network_kde_forward.1} parent=35 // pred_check_branch
        %1197 = sbr.rel (%p1195) target = $region40
      $region39: #{network_kde_forward.1} parent=35 // pred_region
        %s1198 = smul.u32 2, %s19
      $region40: #{network_kde_forward.1} parent=35 // pred_fallthru
        _
      // Predicated region
      $region41: #{network_kde_forward.1} parent=35 // pred_check
        %p1199 = pneg %p152
      $region42: #{network_kde_forward.1} parent=35 // pred_check_branch
        %1201 = sbr.rel (%p1199) target = $region44
      $region43: #{network_kde_forward.1} parent=35 // pred_region
        %s1202 = smul.u32 2, %s19
      $region44: #{network_kde_forward.1} parent=35 // pred_fallthru
        _
      // Predicated region
      $region45: #{network_kde_forward.1} parent=35 // pred_check
        %p1203 = pneg %p178
      $region46: #{network_kde_forward.1} parent=35 // pred_check_branch
        %1205 = sbr.rel (%p1203) target = $region48
      $region47: #{network_kde_forward.1} parent=35 // pred_region
        %s1206 = smul.u32 2, %s19
      $region48: #{network_kde_forward.1} parent=35 // pred_fallthru
        _
      // Predicated region
      $region49: #{network_kde_forward.1} parent=35 // pred_check
        %p1207 = pneg %p204
      $region50: #{network_kde_forward.1} parent=35 // pred_check_branch
        %1209 = sbr.rel (%p1207) target = $region52
      $region51: #{network_kde_forward.1} parent=35 // pred_region
        _
      $region52: #{network_kde_forward.1} parent=35 // pred_fallthru
        _
    $region36: #{network_kde_forward.1} parent=5 // pred_fallthru
      _
    %p1210 = scmp.le.s32.totalorder 2, %s14
    // Predicated region
    $region53: #{network_kde_forward.1} parent=5 // pred_check
      %p1211 = pneg %p1210
    $region54: #{network_kde_forward.1} parent=5 // pred_check_branch
      %1213 = sbr.rel (%p1211) target = $region56
    $region55: #{network_kde_forward.1} parent=5 // pred_region
      %s1214 = ssub.s32 %s14, 2
      // Predicated region
      $region57: #{network_kde_forward.1} parent=55 // pred_check
        %p1215 = pneg %p132
      $region58: #{network_kde_forward.1} parent=55 // pred_check_branch
        %1217 = sbr.rel (%p1215) target = $region60
      $region59: #{network_kde_forward.1} parent=55 // pred_region
        %s1218 = smul.u32 2, %s20
        %p1219 = scmp.lt.s32.totalorder %s1218, 3
        %s1220 = scalar_select %p1219, %s1218, 3
        %s1221 = smul.addr %s1220, 8
        %s1222 = scalar_lea.vmem %s4, %s1221
      $region60: #{network_kde_forward.1} parent=55 // pred_fallthru
        _
      // Predicated region
      $region61: #{network_kde_forward.1} parent=55 // pred_check
        %p1223 = pneg %p158
      $region62: #{network_kde_forward.1} parent=55 // pred_check_branch
        %1225 = sbr.rel (%p1223) target = $region64
      $region63: #{network_kde_forward.1} parent=55 // pred_region
        %s1226 = smul.u32 2, %s20
        %p1227 = scmp.lt.s32.totalorder %s1226, 3
        %s1228 = scalar_select %p1227, %s1226, 3
        %s1229 = smul.addr %s1228, 8
        %s1230 = scalar_lea.vmem %s5, %s1229
      $region64: #{network_kde_forward.1} parent=55 // pred_fallthru
        _
      // Predicated region
      $region65: #{network_kde_forward.1} parent=55 // pred_check
        %p1231 = pneg %p184
      $region66: #{network_kde_forward.1} parent=55 // pred_check_branch
        %1233 = sbr.rel (%p1231) target = $region68
      $region67: #{network_kde_forward.1} parent=55 // pred_region
        %s1234 = smul.u32 2, %s20
        %p1235 = scmp.lt.s32.totalorder %s1234, 3
        %s1236 = scalar_select %p1235, %s1234, 3
        %s1237 = smul.addr %s1236, 8
        %s1238 = scalar_lea.vmem %s6, %s1237
      $region68: #{network_kde_forward.1} parent=55 // pred_fallthru
        _
      // Predicated region
      $region69: #{network_kde_forward.1} parent=55 // pred_check
        %p1239 = pneg %p210
      $region70: #{network_kde_forward.1} parent=55 // pred_check_branch
        %1241 = sbr.rel (%p1239) target = $region72
      $region71: #{network_kde_forward.1} parent=55 // pred_region
        %p1242 = scmp.lt.s32.totalorder %s20, 1
        %s1243 = scalar_select %p1242, %s20, 1
        %s1244 = smul.addr %s1243, 2
        %s1245 = smul.addr %s1244, 8
        %s1246 = scalar_lea.vmem %s7, %s1245
      $region72: #{network_kde_forward.1} parent=55 // pred_fallthru
        _
    $region56: #{network_kde_forward.1} parent=5 // pred_fallthru
      _
  $region6: #{network_kde_forward.1} parent=0 // loop_footer
    %s18 = sadd.s32 1, %s14
  $region7: #{network_kde_forward.1} parent=0 // loop_footer_branch
    %13 = sbr.rel target = $region3
  $region8: #{network_kde_forward.1} parent=0 // loop_exit
    _

</llo_original>
